<compile_context>
chip_gen: v7x
topology: tpu7x:2x2x1
jax: 0.10.0
libtpu: 0.0.40
codegen_flags: <defaults>
</compile_context>

<pallas_src>
import functools

import jax
import jax.numpy as jnp
import numpy as np
from jax.experimental import pallas as pl
from jax.experimental.pallas import tpu as pltpu

# ------------------------------- config -------------------------------------
N_EMBD = 32
N_HEAD = 4
HEAD_SIZE = N_EMBD // N_HEAD
BLOCK_SIZE = 8          # max sequence length (size of the tril buffer)
DROPOUT = 0.0           # eval mode -> nn.Dropout is identity


# ------------------------------- kernel -------------------------------------
def mha_kernel(x_ref, wqkv_ref, wproj_ref, bproj_ref, out_ref, *, n_head, head_size):
    """Fused multi-head causal self-attention.

    x_ref:     (B, T, C)           activations, f32
    wqkv_ref:  (C, 3*C)            [Wq | Wk | Wv], head-major columns, bf16
    wproj_ref: (n_head, hs, C)     per-head rows of W_proj^T, bf16
    bproj_ref: (1, C)              projection bias row, f32
    out_ref:   (B, T, C)           output, f32
    """
    B, T, C = x_ref.shape
    M = B * T

    # Fused QKV: one plain 2-D MXU matmul, bf16 operands, f32 accumulation.
    x2d = x_ref[...].reshape(M, C).astype(jnp.bfloat16)
    qkv2d = jnp.dot(x2d, wqkv_ref[...], preferred_element_type=jnp.float32)  # (M, 3C)
    qkv = qkv2d.reshape(B, T, 3 * C)

    # Causal mask (the registered tril buffer), built on the fly.
    row = jax.lax.broadcasted_iota(jnp.int32, (T, T), 0)
    col = jax.lax.broadcasted_iota(jnp.int32, (T, T), 1)
    causal = (row >= col)[None]                                              # (1, T, T)

    scale = head_size ** -0.5
    acc = jnp.zeros((M, C), jnp.float32)   # accumulated per-head projections

    for h in range(n_head):
        lo = h * head_size
        q = qkv[:, :, lo:lo + head_size]                                     # (B, T, hs)
        k = qkv[:, :, C + lo:C + lo + head_size]
        v = qkv[:, :, 2 * C + lo:2 * C + lo + head_size]

        # Scores (per-batch, inherently batched); bf16 MXU operands, f32 acc.
        s = jnp.einsum('btd,bkd->btk',
                       q.astype(jnp.bfloat16), k.astype(jnp.bfloat16),
                       preferred_element_type=jnp.float32) * scale           # (B, T, T)
        s = jnp.where(causal, s, -jnp.inf)            # masked_fill(tril == 0, -inf)
        s = s - jnp.max(s, axis=-1, keepdims=True)    # F.softmax internal shift
        p = jnp.exp(s)
        p = p * pl.reciprocal(jnp.sum(p, axis=-1, keepdims=True), approx=True)
        # attention dropout: identity (p = 0.0 / eval mode)

        o_h = jnp.einsum('btk,bkd->btd',
                         p.astype(jnp.bfloat16), v.astype(jnp.bfloat16),
                         preferred_element_type=jnp.float32)                 # (B, T, hs)

        # Per-head partial projection accumulated in f32 (no lane-axis concat).
        acc = acc + jnp.dot(o_h.reshape(M, head_size).astype(jnp.bfloat16),
                            wproj_ref[h], preferred_element_type=jnp.float32)

    out2d = acc + bproj_ref[...]                      # (1, C) bias row broadcast
    out_ref[...] = out2d.reshape(B, T, C)
    # output dropout: identity (p = 0.0 / eval mode)


# --------------------------- pallas_call wrapper -----------------------------
def multi_head_attention(x, wqkv, wproj_heads, bproj, *, n_head, head_size):
    B, T, C = x.shape
    kernel = functools.partial(mha_kernel, n_head=n_head, head_size=head_size)
    return pl.pallas_call(
        kernel,
        grid=(1,),   # single fused step: one launch, weights DMA'd into VMEM once
        in_specs=[
            pl.BlockSpec((B, T, C), lambda i: (0, 0, 0)),
            pl.BlockSpec(wqkv.shape, lambda i: (0, 0)),
            pl.BlockSpec(wproj_heads.shape, lambda i: (0, 0, 0)),
            pl.BlockSpec(bproj.shape, lambda i: (0, 0)),
        ],
        out_specs=pl.BlockSpec((B, T, C), lambda i: (0, 0, 0)),
        out_shape=jax.ShapeDtypeStruct((B, T, C), jnp.float32),
        compiler_params=pltpu.CompilerParams(dimension_semantics=("arbitrary",)),
    )(x, wqkv, wproj_heads, bproj)


# ------------------------------ param helpers --------------------------------
def init_params(key, n_embd=N_EMBD, n_head=N_HEAD):
    hs = n_embd // n_head
    std = 1.0 / (n_embd ** 0.5)
    kq, kk, kv, kp, kb = jax.random.split(key, 5)
    # torch nn.Linear layout: weight is (out_features, in_features)
    wq = std * jax.random.normal(kq, (n_head, hs, n_embd), jnp.float32)
    wk = std * jax.random.normal(kk, (n_head, hs, n_embd), jnp.float32)
    wv = std * jax.random.normal(kv, (n_head, hs, n_embd), jnp.float32)
    w_proj = std * jax.random.normal(kp, (n_embd, n_embd), jnp.float32)
    b_proj = std * jax.random.normal(kb, (n_embd,), jnp.float32)
    return wq, wk, wv, w_proj, b_proj


def pack_params(wq, wk, wv, w_proj, b_proj):
    n_head, hs, C = wq.shape
    # Pre-transpose to (in, out), head-major along columns, then fuse [Q|K|V].
    q_all = jnp.transpose(wq, (2, 0, 1)).reshape(C, n_head * hs)
    k_all = jnp.transpose(wk, (2, 0, 1)).reshape(C, n_head * hs)
    v_all = jnp.transpose(wv, (2, 0, 1)).reshape(C, n_head * hs)
    wqkv = jnp.concatenate([q_all, k_all, v_all], axis=1).astype(jnp.bfloat16)  # (C, 3C)
    # W_proj^T rows split per head -> leading-dim indexed inside the kernel.
    wproj_heads = jnp.asarray(w_proj).T.reshape(n_head, hs, C).astype(jnp.bfloat16)
    bproj = jnp.asarray(b_proj, jnp.float32).reshape(1, C)
    return wqkv, wproj_heads, bproj


# ------------------------------ pure-JAX reference ---------------------------
def mha_ref(x, wq, wk, wv, w_proj, b_proj):
    n_head, hs, C = wq.shape
    B, T, _ = x.shape
    tril = jnp.tril(jnp.ones((T, T), dtype=bool))
    hp = jax.lax.Precision.HIGHEST
    outs = []
    for h in range(n_head):
        q = jnp.einsum('btc,sc->bts', x, wq[h], precision=hp)
        k = jnp.einsum('btc,sc->bts', x, wk[h], precision=hp)
        v = jnp.einsum('btc,sc->bts', x, wv[h], precision=hp)
        wei = jnp.einsum('bts,bks->btk', q, k, precision=hp) * hs ** -0.5
        wei = jnp.where(tril[None], wei, -jnp.inf)
        wei = jax.nn.softmax(wei, axis=-1)
        outs.append(jnp.einsum('btk,bks->bts', wei, v, precision=hp))
    o = jnp.concatenate(outs, axis=-1)
    return jnp.einsum('btc,dc->btd', o, w_proj, precision=hp) + b_proj


# ----------------------------------- main ------------------------------------
if __name__ == "__main__":
    key = jax.random.PRNGKey(0)
    kx, kparam = jax.random.split(key)

    B, T = 2, BLOCK_SIZE
    x = jax.random.normal(kx, (B, T, N_EMBD), jnp.float32)

    wq, wk, wv, w_proj, b_proj = init_params(kparam)
    wqkv, wproj_heads, bproj = pack_params(wq, wk, wv, w_proj, b_proj)

    out = multi_head_attention(x, wqkv, wproj_heads, bproj,
                               n_head=N_HEAD, head_size=HEAD_SIZE)
    jax.block_until_ready(out)
    assert out.shape == (B, T, N_EMBD), out.shape
    assert out.dtype == jnp.float32

    ref = mha_ref(x, wq, wk, wv, w_proj, b_proj)
    # Tolerance accounts for bf16 MXU operands (kernel) vs HIGHEST-precision
    # f32 matmuls (reference) plus the approx EUP reciprocal in the softmax.
    np.testing.assert_allclose(np.asarray(out), np.asarray(ref),
                               rtol=3e-2, atol=3e-2)
    print("KERNEL_OK")
</pallas_src>

<mosaic_0001>
module attributes {stable_mosaic.version = 11 : i64} {
  func.func @mha_kernel(%arg0: i32, %arg1: memref<2x8x32xf32, #tpu.memory_space<vmem>>, %arg2: memref<32x96xbf16, #tpu.memory_space<vmem>>, %arg3: memref<4x8x32xbf16, #tpu.memory_space<vmem>>, %arg4: memref<1x32xf32, #tpu.memory_space<vmem>>, %arg5: memref<2x8x32xf32, #tpu.memory_space<vmem>>) attributes {dimension_semantics = [#tpu.dimension_semantics<arbitrary>], iteration_bounds = array<i64: 1>, scalar_prefetch = 0 : i64, scratch_operands = 0 : i64, tpu.core_type = #tpu.core_type<tc>, window_params = [{pipeline_mode = #tpu.pipeline_mode<synchronous>, transform_indices = @transform_0, window_bounds = array<i64: 2, 8, 32>}, {pipeline_mode = #tpu.pipeline_mode<synchronous>, transform_indices = @transform_1, window_bounds = array<i64: 32, 96>}, {pipeline_mode = #tpu.pipeline_mode<synchronous>, transform_indices = @transform_2, window_bounds = array<i64: 4, 8, 32>}, {pipeline_mode = #tpu.pipeline_mode<synchronous>, transform_indices = @transform_3, window_bounds = array<i64: 1, 32>}, {pipeline_mode = #tpu.pipeline_mode<synchronous>, transform_indices = @transform_4, window_bounds = array<i64: 2, 8, 32>}]} {
    %c0 = arith.constant 0 : index
    %c0_0 = arith.constant 0 : index
    %c0_1 = arith.constant 0 : index
    %0 = vector.load %arg1[%c0, %c0_0, %c0_1] : memref<2x8x32xf32, #tpu.memory_space<vmem>>, vector<2x8x32xf32>
    %1 = vector.shape_cast %0 : vector<2x8x32xf32> to vector<16x32xf32>
    %2 = arith.truncf %1 : vector<16x32xf32> to vector<16x32xbf16>
    %c0_2 = arith.constant 0 : index
    %c0_3 = arith.constant 0 : index
    %3 = vector.load %arg2[%c0_2, %c0_3] : memref<32x96xbf16, #tpu.memory_space<vmem>>, vector<32x96xbf16>
    %cst = arith.constant dense<0.000000e+00> : vector<16x96xf32>
    %4 = tpu.matmul %2, %3, %cst {dimension_numbers = #tpu.dot_dimension_numbers<[1], [0], [0], [1], [0, 0, 1, 1], [], []>} : vector<16x32xbf16>, vector<32x96xbf16>, vector<16x96xf32> -> vector<16x96xf32>
    %5 = vector.shape_cast %4 : vector<16x96xf32> to vector<2x8x96xf32>
    %6 = tpu.iota {dimensions = array<i32: 0>} : vector<8x8xi32>
    %7 = tpu.iota {dimensions = array<i32: 1>} : vector<8x8xi32>
    %8 = arith.cmpi sge, %6, %7 : vector<8x8xi32>
    %9 = vector.shape_cast %8 : vector<8x8xi1> to vector<1x8x8xi1>
    %cst_4 = arith.constant 0.000000e+00 : f32
    %10 = vector.broadcast %cst_4 : f32 to vector<16x32xf32>
    %11 = vector.extract_strided_slice %5 {offsets = [0, 0, 0], sizes = [2, 8, 8], strides = [1, 1, 1]} : vector<2x8x96xf32> to vector<2x8x8xf32>
    %12 = vector.extract_strided_slice %5 {offsets = [0, 0, 32], sizes = [2, 8, 8], strides = [1, 1, 1]} : vector<2x8x96xf32> to vector<2x8x8xf32>
    %13 = vector.extract_strided_slice %5 {offsets = [0, 0, 64], sizes = [2, 8, 8], strides = [1, 1, 1]} : vector<2x8x96xf32> to vector<2x8x8xf32>
    %14 = arith.truncf %11 : vector<2x8x8xf32> to vector<2x8x8xbf16>
    %15 = arith.truncf %12 : vector<2x8x8xf32> to vector<2x8x8xbf16>
    "tpu.trace_start"() <{level = 10 : i32, message = "btd,bkd->btk"}> : () -> ()
    %cst_5 = arith.constant dense<0.000000e+00> : vector<2x8x8xf32>
    %16 = tpu.matmul %14, %15, %cst_5 {dimension_numbers = #tpu.dot_dimension_numbers<[2], [2], [1], [1], [0, 0, 0, 1, 1, 1], [0], [0]>} : vector<2x8x8xbf16>, vector<2x8x8xbf16>, vector<2x8x8xf32> -> vector<2x8x8xf32>
    "tpu.trace_stop"() : () -> ()
    %cst_6 = arith.constant 0.353553385 : f32
    %17 = vector.broadcast %cst_6 : f32 to vector<2x8x8xf32>
    %18 = arith.mulf %16, %17 : vector<2x8x8xf32>
    %cst_7 = arith.constant 0xFF800000 : f32
    %19 = vector.shape_cast %9 : vector<1x8x8xi1> to vector<1x8x8xi1>
    %20 = vector.broadcast %19 : vector<1x8x8xi1> to vector<2x8x8xi1>
    %21 = vector.broadcast %cst_7 : f32 to vector<2x8x8xf32>
    %22 = arith.select %20, %18, %21 : vector<2x8x8xi1>, vector<2x8x8xf32>
    %cst_8 = arith.constant dense<0xFF800000> : vector<2x8xf32>
    %23 = vector.multi_reduction <maximumf>, %22, %cst_8 [2] : vector<2x8x8xf32> to vector<2x8xf32>
    %24 = vector.shape_cast %23 : vector<2x8xf32> to vector<2x8x1xf32>
    %25 = vector.broadcast %24 : vector<2x8x1xf32> to vector<2x8x8xf32>
    %26 = arith.subf %22, %25 : vector<2x8x8xf32>
    %27 = math.exp %26 : vector<2x8x8xf32>
    %cst_9 = arith.constant dense<0.000000e+00> : vector<2x8xf32>
    %28 = vector.multi_reduction <add>, %27, %cst_9 [2] : vector<2x8x8xf32> to vector<2x8xf32>
    %29 = vector.shape_cast %28 : vector<2x8xf32> to vector<2x8x1xf32>
    %30 = tpu.reciprocal %29 {approx = true} : vector<2x8x1xf32> -> vector<2x8x1xf32>
    %31 = vector.broadcast %30 : vector<2x8x1xf32> to vector<2x8x8xf32>
    %32 = arith.mulf %27, %31 : vector<2x8x8xf32>
    %33 = arith.truncf %32 : vector<2x8x8xf32> to vector<2x8x8xbf16>
    %34 = arith.truncf %13 : vector<2x8x8xf32> to vector<2x8x8xbf16>
    "tpu.trace_start"() <{level = 10 : i32, message = "btk,bkd->btd"}> : () -> ()
    %cst_10 = arith.constant dense<0.000000e+00> : vector<2x8x8xf32>
    %35 = tpu.matmul %33, %34, %cst_10 {dimension_numbers = #tpu.dot_dimension_numbers<[2], [1], [1], [2], [0, 0, 0, 1, 1, 2], [0], [0]>} : vector<2x8x8xbf16>, vector<2x8x8xbf16>, vector<2x8x8xf32> -> vector<2x8x8xf32>
    "tpu.trace_stop"() : () -> ()
    %36 = vector.shape_cast %35 : vector<2x8x8xf32> to vector<16x8xf32>
    %37 = arith.truncf %36 : vector<16x8xf32> to vector<16x8xbf16>
    %c0_11 = arith.constant 0 : index
    %c0_12 = arith.constant 0 : index
    %c0_13 = arith.constant 0 : index
    %38 = vector.load %arg3[%c0_11, %c0_12, %c0_13] : memref<4x8x32xbf16, #tpu.memory_space<vmem>>, vector<1x8x32xbf16>
    %39 = vector.shape_cast %38 : vector<1x8x32xbf16> to vector<8x32xbf16>
    %cst_14 = arith.constant dense<0.000000e+00> : vector<16x32xf32>
    %40 = tpu.matmul %37, %39, %cst_14 {dimension_numbers = #tpu.dot_dimension_numbers<[1], [0], [0], [1], [0, 0, 1, 1], [], []>} : vector<16x8xbf16>, vector<8x32xbf16>, vector<16x32xf32> -> vector<16x32xf32>
    %41 = arith.addf %10, %40 : vector<16x32xf32>
    %42 = vector.extract_strided_slice %5 {offsets = [0, 0, 8], sizes = [2, 8, 8], strides = [1, 1, 1]} : vector<2x8x96xf32> to vector<2x8x8xf32>
    %43 = vector.extract_strided_slice %5 {offsets = [0, 0, 40], sizes = [2, 8, 8], strides = [1, 1, 1]} : vector<2x8x96xf32> to vector<2x8x8xf32>
    %44 = vector.extract_strided_slice %5 {offsets = [0, 0, 72], sizes = [2, 8, 8], strides = [1, 1, 1]} : vector<2x8x96xf32> to vector<2x8x8xf32>
    %45 = arith.truncf %42 : vector<2x8x8xf32> to vector<2x8x8xbf16>
    %46 = arith.truncf %43 : vector<2x8x8xf32> to vector<2x8x8xbf16>
    "tpu.trace_start"() <{level = 10 : i32, message = "btd,bkd->btk"}> : () -> ()
    %cst_15 = arith.constant dense<0.000000e+00> : vector<2x8x8xf32>
    %47 = tpu.matmul %45, %46, %cst_15 {dimension_numbers = #tpu.dot_dimension_numbers<[2], [2], [1], [1], [0, 0, 0, 1, 1, 1], [0], [0]>} : vector<2x8x8xbf16>, vector<2x8x8xbf16>, vector<2x8x8xf32> -> vector<2x8x8xf32>
    "tpu.trace_stop"() : () -> ()
    %cst_16 = arith.constant 0.353553385 : f32
    %48 = vector.broadcast %cst_16 : f32 to vector<2x8x8xf32>
    %49 = arith.mulf %47, %48 : vector<2x8x8xf32>
    %cst_17 = arith.constant 0xFF800000 : f32
    %50 = vector.shape_cast %9 : vector<1x8x8xi1> to vector<1x8x8xi1>
    %51 = vector.broadcast %50 : vector<1x8x8xi1> to vector<2x8x8xi1>
    %52 = vector.broadcast %cst_17 : f32 to vector<2x8x8xf32>
    %53 = arith.select %51, %49, %52 : vector<2x8x8xi1>, vector<2x8x8xf32>
    %cst_18 = arith.constant dense<0xFF800000> : vector<2x8xf32>
    %54 = vector.multi_reduction <maximumf>, %53, %cst_18 [2] : vector<2x8x8xf32> to vector<2x8xf32>
    %55 = vector.shape_cast %54 : vector<2x8xf32> to vector<2x8x1xf32>
    %56 = vector.broadcast %55 : vector<2x8x1xf32> to vector<2x8x8xf32>
    %57 = arith.subf %53, %56 : vector<2x8x8xf32>
    %58 = math.exp %57 : vector<2x8x8xf32>
    %cst_19 = arith.constant dense<0.000000e+00> : vector<2x8xf32>
    %59 = vector.multi_reduction <add>, %58, %cst_19 [2] : vector<2x8x8xf32> to vector<2x8xf32>
    %60 = vector.shape_cast %59 : vector<2x8xf32> to vector<2x8x1xf32>
    %61 = tpu.reciprocal %60 {approx = true} : vector<2x8x1xf32> -> vector<2x8x1xf32>
    %62 = vector.broadcast %61 : vector<2x8x1xf32> to vector<2x8x8xf32>
    %63 = arith.mulf %58, %62 : vector<2x8x8xf32>
    %64 = arith.truncf %63 : vector<2x8x8xf32> to vector<2x8x8xbf16>
    %65 = arith.truncf %44 : vector<2x8x8xf32> to vector<2x8x8xbf16>
    "tpu.trace_start"() <{level = 10 : i32, message = "btk,bkd->btd"}> : () -> ()
    %cst_20 = arith.constant dense<0.000000e+00> : vector<2x8x8xf32>
    %66 = tpu.matmul %64, %65, %cst_20 {dimension_numbers = #tpu.dot_dimension_numbers<[2], [1], [1], [2], [0, 0, 0, 1, 1, 2], [0], [0]>} : vector<2x8x8xbf16>, vector<2x8x8xbf16>, vector<2x8x8xf32> -> vector<2x8x8xf32>
    "tpu.trace_stop"() : () -> ()
    %67 = vector.shape_cast %66 : vector<2x8x8xf32> to vector<16x8xf32>
    %68 = arith.truncf %67 : vector<16x8xf32> to vector<16x8xbf16>
    %c1 = arith.constant 1 : index
    %c0_21 = arith.constant 0 : index
    %c0_22 = arith.constant 0 : index
    %69 = vector.load %arg3[%c1, %c0_21, %c0_22] : memref<4x8x32xbf16, #tpu.memory_space<vmem>>, vector<1x8x32xbf16>
    %70 = vector.shape_cast %69 : vector<1x8x32xbf16> to vector<8x32xbf16>
    %cst_23 = arith.constant dense<0.000000e+00> : vector<16x32xf32>
    %71 = tpu.matmul %68, %70, %cst_23 {dimension_numbers = #tpu.dot_dimension_numbers<[1], [0], [0], [1], [0, 0, 1, 1], [], []>} : vector<16x8xbf16>, vector<8x32xbf16>, vector<16x32xf32> -> vector<16x32xf32>
    %72 = arith.addf %41, %71 : vector<16x32xf32>
    %73 = vector.extract_strided_slice %5 {offsets = [0, 0, 16], sizes = [2, 8, 8], strides = [1, 1, 1]} : vector<2x8x96xf32> to vector<2x8x8xf32>
    %74 = vector.extract_strided_slice %5 {offsets = [0, 0, 48], sizes = [2, 8, 8], strides = [1, 1, 1]} : vector<2x8x96xf32> to vector<2x8x8xf32>
    %75 = vector.extract_strided_slice %5 {offsets = [0, 0, 80], sizes = [2, 8, 8], strides = [1, 1, 1]} : vector<2x8x96xf32> to vector<2x8x8xf32>
    %76 = arith.truncf %73 : vector<2x8x8xf32> to vector<2x8x8xbf16>
    %77 = arith.truncf %74 : vector<2x8x8xf32> to vector<2x8x8xbf16>
    "tpu.trace_start"() <{level = 10 : i32, message = "btd,bkd->btk"}> : () -> ()
    %cst_24 = arith.constant dense<0.000000e+00> : vector<2x8x8xf32>
    %78 = tpu.matmul %76, %77, %cst_24 {dimension_numbers = #tpu.dot_dimension_numbers<[2], [2], [1], [1], [0, 0, 0, 1, 1, 1], [0], [0]>} : vector<2x8x8xbf16>, vector<2x8x8xbf16>, vector<2x8x8xf32> -> vector<2x8x8xf32>
    "tpu.trace_stop"() : () -> ()
    %cst_25 = arith.constant 0.353553385 : f32
    %79 = vector.broadcast %cst_25 : f32 to vector<2x8x8xf32>
    %80 = arith.mulf %78, %79 : vector<2x8x8xf32>
    %cst_26 = arith.constant 0xFF800000 : f32
    %81 = vector.shape_cast %9 : vector<1x8x8xi1> to vector<1x8x8xi1>
    %82 = vector.broadcast %81 : vector<1x8x8xi1> to vector<2x8x8xi1>
    %83 = vector.broadcast %cst_26 : f32 to vector<2x8x8xf32>
    %84 = arith.select %82, %80, %83 : vector<2x8x8xi1>, vector<2x8x8xf32>
    %cst_27 = arith.constant dense<0xFF800000> : vector<2x8xf32>
    %85 = vector.multi_reduction <maximumf>, %84, %cst_27 [2] : vector<2x8x8xf32> to vector<2x8xf32>
    %86 = vector.shape_cast %85 : vector<2x8xf32> to vector<2x8x1xf32>
    %87 = vector.broadcast %86 : vector<2x8x1xf32> to vector<2x8x8xf32>
    %88 = arith.subf %84, %87 : vector<2x8x8xf32>
    %89 = math.exp %88 : vector<2x8x8xf32>
    %cst_28 = arith.constant dense<0.000000e+00> : vector<2x8xf32>
    %90 = vector.multi_reduction <add>, %89, %cst_28 [2] : vector<2x8x8xf32> to vector<2x8xf32>
    %91 = vector.shape_cast %90 : vector<2x8xf32> to vector<2x8x1xf32>
    %92 = tpu.reciprocal %91 {approx = true} : vector<2x8x1xf32> -> vector<2x8x1xf32>
    %93 = vector.broadcast %92 : vector<2x8x1xf32> to vector<2x8x8xf32>
    %94 = arith.mulf %89, %93 : vector<2x8x8xf32>
    %95 = arith.truncf %94 : vector<2x8x8xf32> to vector<2x8x8xbf16>
    %96 = arith.truncf %75 : vector<2x8x8xf32> to vector<2x8x8xbf16>
    "tpu.trace_start"() <{level = 10 : i32, message = "btk,bkd->btd"}> : () -> ()
    %cst_29 = arith.constant dense<0.000000e+00> : vector<2x8x8xf32>
    %97 = tpu.matmul %95, %96, %cst_29 {dimension_numbers = #tpu.dot_dimension_numbers<[2], [1], [1], [2], [0, 0, 0, 1, 1, 2], [0], [0]>} : vector<2x8x8xbf16>, vector<2x8x8xbf16>, vector<2x8x8xf32> -> vector<2x8x8xf32>
    "tpu.trace_stop"() : () -> ()
    %98 = vector.shape_cast %97 : vector<2x8x8xf32> to vector<16x8xf32>
    %99 = arith.truncf %98 : vector<16x8xf32> to vector<16x8xbf16>
    %c2 = arith.constant 2 : index
    %c0_30 = arith.constant 0 : index
    %c0_31 = arith.constant 0 : index
    %100 = vector.load %arg3[%c2, %c0_30, %c0_31] : memref<4x8x32xbf16, #tpu.memory_space<vmem>>, vector<1x8x32xbf16>
    %101 = vector.shape_cast %100 : vector<1x8x32xbf16> to vector<8x32xbf16>
    %cst_32 = arith.constant dense<0.000000e+00> : vector<16x32xf32>
    %102 = tpu.matmul %99, %101, %cst_32 {dimension_numbers = #tpu.dot_dimension_numbers<[1], [0], [0], [1], [0, 0, 1, 1], [], []>} : vector<16x8xbf16>, vector<8x32xbf16>, vector<16x32xf32> -> vector<16x32xf32>
    %103 = arith.addf %72, %102 : vector<16x32xf32>
    %104 = vector.extract_strided_slice %5 {offsets = [0, 0, 24], sizes = [2, 8, 8], strides = [1, 1, 1]} : vector<2x8x96xf32> to vector<2x8x8xf32>
    %105 = vector.extract_strided_slice %5 {offsets = [0, 0, 56], sizes = [2, 8, 8], strides = [1, 1, 1]} : vector<2x8x96xf32> to vector<2x8x8xf32>
    %106 = vector.extract_strided_slice %5 {offsets = [0, 0, 88], sizes = [2, 8, 8], strides = [1, 1, 1]} : vector<2x8x96xf32> to vector<2x8x8xf32>
    %107 = arith.truncf %104 : vector<2x8x8xf32> to vector<2x8x8xbf16>
    %108 = arith.truncf %105 : vector<2x8x8xf32> to vector<2x8x8xbf16>
    "tpu.trace_start"() <{level = 10 : i32, message = "btd,bkd->btk"}> : () -> ()
    %cst_33 = arith.constant dense<0.000000e+00> : vector<2x8x8xf32>
    %109 = tpu.matmul %107, %108, %cst_33 {dimension_numbers = #tpu.dot_dimension_numbers<[2], [2], [1], [1], [0, 0, 0, 1, 1, 1], [0], [0]>} : vector<2x8x8xbf16>, vector<2x8x8xbf16>, vector<2x8x8xf32> -> vector<2x8x8xf32>
    "tpu.trace_stop"() : () -> ()
    %cst_34 = arith.constant 0.353553385 : f32
    %110 = vector.broadcast %cst_34 : f32 to vector<2x8x8xf32>
    %111 = arith.mulf %109, %110 : vector<2x8x8xf32>
    %cst_35 = arith.constant 0xFF800000 : f32
    %112 = vector.shape_cast %9 : vector<1x8x8xi1> to vector<1x8x8xi1>
    %113 = vector.broadcast %112 : vector<1x8x8xi1> to vector<2x8x8xi1>
    %114 = vector.broadcast %cst_35 : f32 to vector<2x8x8xf32>
    %115 = arith.select %113, %111, %114 : vector<2x8x8xi1>, vector<2x8x8xf32>
    %cst_36 = arith.constant dense<0xFF800000> : vector<2x8xf32>
    %116 = vector.multi_reduction <maximumf>, %115, %cst_36 [2] : vector<2x8x8xf32> to vector<2x8xf32>
    %117 = vector.shape_cast %116 : vector<2x8xf32> to vector<2x8x1xf32>
    %118 = vector.broadcast %117 : vector<2x8x1xf32> to vector<2x8x8xf32>
    %119 = arith.subf %115, %118 : vector<2x8x8xf32>
    %120 = math.exp %119 : vector<2x8x8xf32>
    %cst_37 = arith.constant dense<0.000000e+00> : vector<2x8xf32>
    %121 = vector.multi_reduction <add>, %120, %cst_37 [2] : vector<2x8x8xf32> to vector<2x8xf32>
    %122 = vector.shape_cast %121 : vector<2x8xf32> to vector<2x8x1xf32>
    %123 = tpu.reciprocal %122 {approx = true} : vector<2x8x1xf32> -> vector<2x8x1xf32>
    %124 = vector.broadcast %123 : vector<2x8x1xf32> to vector<2x8x8xf32>
    %125 = arith.mulf %120, %124 : vector<2x8x8xf32>
    %126 = arith.truncf %125 : vector<2x8x8xf32> to vector<2x8x8xbf16>
    %127 = arith.truncf %106 : vector<2x8x8xf32> to vector<2x8x8xbf16>
    "tpu.trace_start"() <{level = 10 : i32, message = "btk,bkd->btd"}> : () -> ()
    %cst_38 = arith.constant dense<0.000000e+00> : vector<2x8x8xf32>
    %128 = tpu.matmul %126, %127, %cst_38 {dimension_numbers = #tpu.dot_dimension_numbers<[2], [1], [1], [2], [0, 0, 0, 1, 1, 2], [0], [0]>} : vector<2x8x8xbf16>, vector<2x8x8xbf16>, vector<2x8x8xf32> -> vector<2x8x8xf32>
    "tpu.trace_stop"() : () -> ()
    %129 = vector.shape_cast %128 : vector<2x8x8xf32> to vector<16x8xf32>
    %130 = arith.truncf %129 : vector<16x8xf32> to vector<16x8xbf16>
    %c3 = arith.constant 3 : index
    %c0_39 = arith.constant 0 : index
    %c0_40 = arith.constant 0 : index
    %131 = vector.load %arg3[%c3, %c0_39, %c0_40] : memref<4x8x32xbf16, #tpu.memory_space<vmem>>, vector<1x8x32xbf16>
    %132 = vector.shape_cast %131 : vector<1x8x32xbf16> to vector<8x32xbf16>
    %cst_41 = arith.constant dense<0.000000e+00> : vector<16x32xf32>
    %133 = tpu.matmul %130, %132, %cst_41 {dimension_numbers = #tpu.dot_dimension_numbers<[1], [0], [0], [1], [0, 0, 1, 1], [], []>} : vector<16x8xbf16>, vector<8x32xbf16>, vector<16x32xf32> -> vector<16x32xf32>
    %134 = arith.addf %103, %133 : vector<16x32xf32>
    %c0_42 = arith.constant 0 : index
    %c0_43 = arith.constant 0 : index
    %135 = vector.load %arg4[%c0_42, %c0_43] : memref<1x32xf32, #tpu.memory_space<vmem>>, vector<1x32xf32>
    %136 = vector.broadcast %135 : vector<1x32xf32> to vector<16x32xf32>
    %137 = arith.addf %134, %136 : vector<16x32xf32>
    %138 = vector.shape_cast %137 : vector<16x32xf32> to vector<2x8x32xf32>
    %c0_44 = arith.constant 0 : index
    %c0_45 = arith.constant 0 : index
    %c0_46 = arith.constant 0 : index
    %139 = vector.load %arg5[%c0_44, %c0_45, %c0_46] : memref<2x8x32xf32, #tpu.memory_space<vmem>>, vector<2x8x32xf32>
    tpu.vector_store %arg5[%c0_44, %c0_45, %c0_46], %138 {strides = array<i32>} : memref<2x8x32xf32, #tpu.memory_space<vmem>>, vector<2x8x32xf32>,
    return
  }
  func.func @transform_0(%arg0: i32) -> (i32, i32, i32) {
    %c0_i32 = arith.constant 0 : i32
    %c0_i32_0 = arith.constant 0 : i32
    %c0_i32_1 = arith.constant 0 : i32
    %c0_i32_2 = arith.constant 0 : i32
    return %c0_i32, %c0_i32_0, %c0_i32_1 : i32, i32, i32
  }
  func.func @transform_1(%arg0: i32) -> (i32, i32) {
    %c0_i32 = arith.constant 0 : i32
    %c0_i32_0 = arith.constant 0 : i32
    %c0_i32_1 = arith.constant 0 : i32
    return %c0_i32, %c0_i32_0 : i32, i32
  }
  func.func @transform_2(%arg0: i32) -> (i32, i32, i32) {
    %c0_i32 = arith.constant 0 : i32
    %c0_i32_0 = arith.constant 0 : i32
    %c0_i32_1 = arith.constant 0 : i32
    %c0_i32_2 = arith.constant 0 : i32
    return %c0_i32, %c0_i32_0, %c0_i32_1 : i32, i32, i32
  }
  func.func @transform_3(%arg0: i32) -> (i32, i32) {
    %c0_i32 = arith.constant 0 : i32
    %c0_i32_0 = arith.constant 0 : i32
    %c0_i32_1 = arith.constant 0 : i32
    return %c0_i32, %c0_i32_0 : i32, i32
  }
  func.func @transform_4(%arg0: i32) -> (i32, i32, i32) {
    %c0_i32 = arith.constant 0 : i32
    %c0_i32_0 = arith.constant 0 : i32
    %c0_i32_1 = arith.constant 0 : i32
    %c0_i32_2 = arith.constant 0 : i32
    return %c0_i32, %c0_i32_0, %c0_i32_1 : i32, i32, i32
  }
}

</mosaic_0001>

<llo_original>
// kernel: tpu_custom_call.1
$region0: #{tpu_custom_call.1}
  #allocation0 [shape = 'u32[]', space=smem, size = 0x4, offset = 0x4, fixed_abs, tag = 'smem constant byte address 0x4 - core index']
  #allocation1 [shape = 'u32[144,128]{1,0:T(1,128)}', space=vmem, size = 0x12000, scoped, tag = 'internal scratch']
  %s0 = inlined_call_operand.hbm [shape: f32[2,8,32], index: 0, kind: input, shape index: {}]
  %s1 = inlined_call_operand.hbm [shape: bf16[32,96], index: 1, kind: input, shape index: {}]
  %s2 = inlined_call_operand.hbm [shape: bf16[4,8,32], index: 2, kind: input, shape index: {}]
  %s3 = inlined_call_operand.vmem [shape: f32[1,32], index: 3, kind: input, shape index: {}]
  %s4 = inlined_call_operand.hbm [shape: f32[2,8,32], index: 4, kind: output, shape index: {}]
  %s5 = sld [smem:[#allocation0]]
  $region38: #{tpu_custom_call.1} parent=0
    _
  %s7 = ssub.s32 1, %s5
  %s8 = scalar_select 0, %s7, %s5
  $region1: #{tpu_custom_call.1} parent=0
    #allocation2 [shape = 'u8[8192]{0}', space=vmem, size = 0x2000, scoped, tag = 'input window, operand 0, single buffered']
    #allocation3 [shape = 's32[1]{0}', space=sflag, size = 0x4, scoped, tag = 'scoped memory for tpu_custom_call.1']
    #allocation4 [shape = 's32[1]{0}', space=sflag, size = 0x4, scoped, tag = 'scoped memory for tpu_custom_call.1']
    #allocation5 [shape = 'u8[8192]{0}', space=vmem, size = 0x2000, scoped, tag = 'input window, operand 1, single buffered']
    #allocation6 [shape = 's32[1]{0}', space=sflag, size = 0x4, scoped, tag = 'scoped memory for tpu_custom_call.1']
    #allocation7 [shape = 'u8[8192]{0}', space=vmem, size = 0x2000, scoped, tag = 'input window, operand 2, single buffered']
    #allocation8 [shape = 'u8[8192]{0}', space=vmem, size = 0x2000, scoped, tag = 'output window, operand 0, single buffered']
    %9 = vsyncpa [#allocation3], 0
    %10 = vsyncpa [#allocation6], 0
    %11 = vsyncpa [#allocation4], 0
    // Predicated region
    $region2: #{tpu_custom_call.1} parent=1 // pred_check
      _
    $region3: #{tpu_custom_call.1} parent=1 // pred_check_branch
      %13 = sbr.rel (0) target = $region5
    $region4: #{tpu_custom_call.1} parent=1 // pred_region
      %s15 = ssub.s32 256, 256
      %16 = vsyncadd [#allocation3], %s15
      %s17 = sshll.u32 [#allocation2], 4
      %s18 = int_to_ptr.vmem [resolvable:$true] %s17
      %23 = dma.hbm_to_vmem [thread:$0]  %s0, 256, %s18, [#allocation3], 128, 128, 8
    $region5: #{tpu_custom_call.1} parent=1 // pred_fallthru
      _
    // Predicated region
    $region6: #{tpu_custom_call.1} parent=1 // pred_check
      _
    $region7: #{tpu_custom_call.1} parent=1 // pred_check_branch
      %25 = sbr.rel (0) target = $region9
    $region8: #{tpu_custom_call.1} parent=1 // pred_region
      %s27 = ssub.s32 256, 256
      %28 = vsyncadd [#allocation6], %s27
      %s29 = sshll.u32 [#allocation5], 4
      %s30 = int_to_ptr.vmem [resolvable:$true] %s29
      %35 = dma.hbm_to_vmem [thread:$0]  %s1, 256, %s30, [#allocation6], 64, 64, 4
    $region9: #{tpu_custom_call.1} parent=1 // pred_fallthru
      _
    // Predicated region
    $region10: #{tpu_custom_call.1} parent=1 // pred_check
      _
    $region11: #{tpu_custom_call.1} parent=1 // pred_check_branch
      %37 = sbr.rel (0) target = $region13
    $region12: #{tpu_custom_call.1} parent=1 // pred_region
      %s39 = ssub.s32 256, 256
      %40 = vsyncadd [#allocation6], %s39
      %s41 = sshll.u32 [#allocation7], 4
      %s42 = int_to_ptr.vmem [resolvable:$true] %s41
      %47 = dma.hbm_to_vmem [thread:$0]  %s2, 256, %s42, [#allocation6], 64, 64, 4
    $region13: #{tpu_custom_call.1} parent=1 // pred_fallthru
      _
    // Predicated region
    $region14: #{tpu_custom_call.1} parent=1 // pred_check
      _
    $region15: #{tpu_custom_call.1} parent=1 // pred_check_branch
      %49 = sbr.rel (0) target = $region17
    $region16: #{tpu_custom_call.1} parent=1 // pred_region
      _
    $region17: #{tpu_custom_call.1} parent=1 // pred_fallthru
      _
    // Predicated region
    $region18: #{tpu_custom_call.1} parent=1 // pred_check
      _
    $region19: #{tpu_custom_call.1} parent=1 // pred_check_branch
      %51 = sbr.rel (0) target = $region21
    $region20: #{tpu_custom_call.1} parent=1 // pred_region
      %52 = dma.done [#allocation3], 256
    $region21: #{tpu_custom_call.1} parent=1 // pred_fallthru
      _
    // Predicated region
    $region22: #{tpu_custom_call.1} parent=1 // pred_check
      _
    $region23: #{tpu_custom_call.1} parent=1 // pred_check_branch
      %54 = sbr.rel (0) target = $region25
    $region24: #{tpu_custom_call.1} parent=1 // pred_region
      %55 = dma.done [#allocation6], 256
    $region25: #{tpu_custom_call.1} parent=1 // pred_fallthru
      _
    // Predicated region
    $region26: #{tpu_custom_call.1} parent=1 // pred_check
      _
    $region27: #{tpu_custom_call.1} parent=1 // pred_check_branch
      %57 = sbr.rel (0) target = $region29
    $region28: #{tpu_custom_call.1} parent=1 // pred_region
      %58 = dma.done [#allocation6], 256
    $region29: #{tpu_custom_call.1} parent=1 // pred_fallthru
      _
    %v60 = vld [vmem:[#allocation2] sm:$0xff]
    %v61 = vld [vmem:[#allocation2 + $0x8] sm:$0xff]
    %v62 = vpack.c.bf16 %v61, %v60
    %v63 = vld [vmem:[#allocation5] sm:$0xf]
    %v64 = vld [vmem:[#allocation5 + $0x4] sm:$0xf]
    %v65 = vld [vmem:[#allocation5 + $0x8] sm:$0xf]
    %v66 = vld [vmem:[#allocation5 + $0xc] sm:$0xf]
    %v71 = vunpack.c.l.b16 %v63
    %v72 = vunpack.c.l.b16 %v64
    %v73 = vunpack.c.l.b16 %v65
    %v74 = vunpack.c.l.b16 %v66
    %v75 = vpack.c.b16 %v72, %v71
    %v76 = vpack.c.b16 %v74, %v73
    %vm79 = vcmask 261120
    %v81 = vsel %vm79, %v62, 0
    %83 = vmatprep.subr.bf16.mxu0 0
    %84 = vmatpush1.bf16.msra.mxu0 %v75
    %85 = vmatprep.subr.bf16.mxu0 0
    %86 = vmatpush1.bf16.msra.mxu0 %v76
    %87 = vmatprep.subr.bf16.mxu0 0
    %88 = vmatpush1.bf16.msra.mxu0 0
    %89 = vmatprep.subr.bf16.mxu0 0
    %90 = vmatpush1.bf16.msra.mxu0 0
    %91 = vmatprep.subr.bf16.mxu0 0
    %92 = vmatpush1.bf16.msra.mxu0 0
    %93 = vmatprep.subr.bf16.mxu0 0
    %94 = vmatpush1.bf16.msra.mxu0 0
    %95 = vmatprep.subr.bf16.mxu0 0
    %96 = vmatpush1.bf16.msra.mxu0 0
    %97 = vmatprep.subr.bf16.mxu0 0
    %98 = vmatpush1.bf16.msra.mxu0 0
    %99 = vmatprep.subr.bf16.mxu0 0
    %100 = vmatpush1.bf16.msra.mxu0 0
    %101 = vmatprep.subr.bf16.mxu0 0
    %102 = vmatpush1.bf16.msra.mxu0 0
    %103 = vmatprep.subr.bf16.mxu0 0
    %104 = vmatpush1.bf16.msra.mxu0 0
    %105 = vmatprep.subr.bf16.mxu0 0
    %106 = vmatpush1.bf16.msra.mxu0 0
    %107 = vmatprep.subr.bf16.mxu0 0
    %108 = vmatpush1.bf16.msra.mxu0 0
    %109 = vmatprep.subr.bf16.mxu0 0
    %110 = vmatpush1.bf16.msra.mxu0 0
    %111 = vmatprep.subr.bf16.mxu0 0
    %112 = vmatpush1.bf16.msra.mxu0 0
    %113 = vmatprep.subr.bf16.mxu0 0
    %114 = vmatpush1.bf16.msra.mxu0 0
    %115 = vmatprep.mubr.bf16.mxu0 0
    %116 = vmatmul.mubr.bf16.gmra.mrb[0].mxu0 %v81
    %v117 = vpop.f32.mrb[0].mxu0
    %v118 = vadd.f32 0.0, %v117
    %v119 = vpop.f32.mrb[0].mxu0
    %v120 = vpop.f32.mrb[0].mxu0
    %v121 = vadd.f32 0.0, %v120
    %v122 = vpop.f32.mrb[0].mxu0
    %123 = vdwg.mxu0
    %v124 = vlaneseq
    %v125 = vshrl.u32 %v124, 7
    %v126 = vlaneseq
    %v127 = vand.u32 %v126, 127
    %vm128 = vcmp.ge.s32.totalorder %v125, %v127
    %v129 = vpack.c.bf16 %v118, %v118
    %v130 = vpack.c.bf16 %v121, %v121
    %132 = vrot.lane.b32.xlu0 %v129, 96
    %v133 = vpop.permute.xlu0 %132
    %vm134 = vcmask 64512
    %v136 = vsel %vm134, %v129, 0
    %v139 = vsel %vm134, %v133, 0
    %141 = vmatprep.subr.bf16.mxu0 0
    %142 = vmatpush1.bf16.xpose.msra.mxu0 %v139
    %143 = vmatprep.subr.bf16.mxu0 0
    %144 = vmatpush1.bf16.xpose.msra.mxu0 0
    %145 = vmatprep.subr.bf16.mxu0 0
    %146 = vmatpush1.bf16.xpose.msra.mxu0 0
    %147 = vmatprep.subr.bf16.mxu0 0
    %148 = vmatpush1.bf16.xpose.msra.mxu0 0
    %149 = vmatprep.subr.bf16.mxu0 0
    %150 = vmatpush1.bf16.xpose.msra.mxu0 0
    %151 = vmatprep.subr.bf16.mxu0 0
    %152 = vmatpush1.bf16.xpose.msra.mxu0 0
    %153 = vmatprep.subr.bf16.mxu0 0
    %154 = vmatpush1.bf16.xpose.msra.mxu0 0
    %155 = vmatprep.subr.bf16.mxu0 0
    %156 = vmatpush1.bf16.xpose.msra.mxu0 0
    %157 = vmatprep.subr.bf16.mxu0 0
    %158 = vmatpush1.bf16.xpose.msra.mxu0 0
    %159 = vmatprep.subr.bf16.mxu0 0
    %160 = vmatpush1.bf16.xpose.msra.mxu0 0
    %161 = vmatprep.subr.bf16.mxu0 0
    %162 = vmatpush1.bf16.xpose.msra.mxu0 0
    %163 = vmatprep.subr.bf16.mxu0 0
    %164 = vmatpush1.bf16.xpose.msra.mxu0 0
    %165 = vmatprep.subr.bf16.mxu0 0
    %166 = vmatpush1.bf16.xpose.msra.mxu0 0
    %167 = vmatprep.subr.bf16.mxu0 0
    %168 = vmatpush1.bf16.xpose.msra.mxu0 0
    %169 = vmatprep.subr.bf16.mxu0 0
    %170 = vmatpush1.bf16.xpose.msra.mxu0 0
    %171 = vmatprep.subr.bf16.mxu0 0
    %172 = vmatpush1.bf16.xpose.msra.mxu0 0
    %173 = vmatprep.mubr.bf16.mxu0 0
    %174 = vmatmul.mubr.bf16.gmra.mrb[0].mxu0 %v136
    %v175 = vpop.f32.mrb[0].mxu0
    %v176 = vadd.f32 0.0, %v175
    %v177 = vpop.f32.mrb[0].mxu0
    %v178 = vpop.f32.mrb[0].mxu0
    %v179 = vpop.f32.mrb[0].mxu0
    %180 = vdwg.mxu0
    %182 = vrot.lane.b32.xlu0 %v130, 96
    %v183 = vpop.permute.xlu0 %182
    %v185 = vsel %vm134, %v130, 0
    %v188 = vsel %vm134, %v183, 0
    %190 = vmatprep.subr.bf16.mxu0 0
    %191 = vmatpush1.bf16.xpose.msra.mxu0 %v188
    %192 = vmatprep.subr.bf16.mxu0 0
    %193 = vmatpush1.bf16.xpose.msra.mxu0 0
    %194 = vmatprep.subr.bf16.mxu0 0
    %195 = vmatpush1.bf16.xpose.msra.mxu0 0
    %196 = vmatprep.subr.bf16.mxu0 0
    %197 = vmatpush1.bf16.xpose.msra.mxu0 0
    %198 = vmatprep.subr.bf16.mxu0 0
    %199 = vmatpush1.bf16.xpose.msra.mxu0 0
    %200 = vmatprep.subr.bf16.mxu0 0
    %201 = vmatpush1.bf16.xpose.msra.mxu0 0
    %202 = vmatprep.subr.bf16.mxu0 0
    %203 = vmatpush1.bf16.xpose.msra.mxu0 0
    %204 = vmatprep.subr.bf16.mxu0 0
    %205 = vmatpush1.bf16.xpose.msra.mxu0 0
    %206 = vmatprep.subr.bf16.mxu0 0
    %207 = vmatpush1.bf16.xpose.msra.mxu0 0
    %208 = vmatprep.subr.bf16.mxu0 0
    %209 = vmatpush1.bf16.xpose.msra.mxu0 0
    %210 = vmatprep.subr.bf16.mxu0 0
    %211 = vmatpush1.bf16.xpose.msra.mxu0 0
    %212 = vmatprep.subr.bf16.mxu0 0
    %213 = vmatpush1.bf16.xpose.msra.mxu0 0
    %214 = vmatprep.subr.bf16.mxu0 0
    %215 = vmatpush1.bf16.xpose.msra.mxu0 0
    %216 = vmatprep.subr.bf16.mxu0 0
    %217 = vmatpush1.bf16.xpose.msra.mxu0 0
    %218 = vmatprep.subr.bf16.mxu0 0
    %219 = vmatpush1.bf16.xpose.msra.mxu0 0
    %220 = vmatprep.subr.bf16.mxu0 0
    %221 = vmatpush1.bf16.xpose.msra.mxu0 0
    %222 = vmatprep.mubr.bf16.mxu0 0
    %223 = vmatmul.mubr.bf16.gmra.mrb[0].mxu0 %v185
    %v224 = vpop.f32.mrb[0].mxu0
    %v225 = vadd.f32 0.0, %v224
    %v226 = vpop.f32.mrb[0].mxu0
    %v227 = vpop.f32.mrb[0].mxu0
    %v228 = vpop.f32.mrb[0].mxu0
    %229 = vdwg.mxu0
    %v230 = vmul.f32 %v176, 0.35355338
    %v231 = vmul.f32 %v225, 0.35355338
    %v232 = vsel %vm128, 1, 0
    %vm233 = vcmp.eq.s32.totalorder %v232, 1
    %v234 = vsel %vm233, %v230, -inf
    %v235 = vsel %vm233, %v231, -inf
    %v236 = vsel %vm134, %v234, -inf
    %237 = vmax.xlane.f32.xlu0 %v236
    %v238 = vpop.xlane.xlu0 %237
    %v239 = vsel %vm134, %v235, -inf
    %240 = vmax.xlane.f32.xlu0 %v239
    %v241 = vpop.xlane.xlu0 %240
    %v242 = vsub.f32 %v234, %v238
    %v243 = vsub.f32 %v235, %v241
    %v244 = vmul.f32 %v242, 1.442695
    %v245 = vpow.pop %v244
    %v246 = vmul.f32 %v243, 1.442695
    %v247 = vpow.pop %v246
    %v248 = vsel %vm134, %v245, 0.0
    %249 = vadd.xlane.f32.xlu0 %v248
    %v250 = vpop.xlane.xlu0 %249
    %v251 = vsel %vm134, %v247, 0.0
    %252 = vadd.xlane.f32.xlu0 %v251
    %v253 = vpop.xlane.xlu0 %252
    %v254 = vrcp.pop %v250
    %v255 = vrcp.pop %v253
    %v256 = vmul.f32 %v245, %v254
    %v257 = vmul.f32 %v247, %v255
    %v258 = vpack.c.bf16 %v256, %v256
    %v259 = vpack.c.bf16 %v257, %v257
    %260 = vrot.lane.b32.xlu0 %v129, 64
    %v261 = vpop.permute.xlu0 %260
    %v263 = vsel %vm134, %v258, 0
    %vm265 = vcmask 1043456
    %v267 = vsel %vm265, %v261, 0
    %269 = vmatprep.subr.bf16.mxu0 0
    %270 = vmatpush1.bf16.msra.mxu0 %v267
    %271 = vmatprep.subr.bf16.mxu0 0
    %272 = vmatpush1.bf16.msra.mxu0 0
    %273 = vmatprep.subr.bf16.mxu0 0
    %274 = vmatpush1.bf16.msra.mxu0 0
    %275 = vmatprep.subr.bf16.mxu0 0
    %276 = vmatpush1.bf16.msra.mxu0 0
    %277 = vmatprep.subr.bf16.mxu0 0
    %278 = vmatpush1.bf16.msra.mxu0 0
    %279 = vmatprep.subr.bf16.mxu0 0
    %280 = vmatpush1.bf16.msra.mxu0 0
    %281 = vmatprep.subr.bf16.mxu0 0
    %282 = vmatpush1.bf16.msra.mxu0 0
    %283 = vmatprep.subr.bf16.mxu0 0
    %284 = vmatpush1.bf16.msra.mxu0 0
    %285 = vmatprep.subr.bf16.mxu0 0
    %286 = vmatpush1.bf16.msra.mxu0 0
    %287 = vmatprep.subr.bf16.mxu0 0
    %288 = vmatpush1.bf16.msra.mxu0 0
    %289 = vmatprep.subr.bf16.mxu0 0
    %290 = vmatpush1.bf16.msra.mxu0 0
    %291 = vmatprep.subr.bf16.mxu0 0
    %292 = vmatpush1.bf16.msra.mxu0 0
    %293 = vmatprep.subr.bf16.mxu0 0
    %294 = vmatpush1.bf16.msra.mxu0 0
    %295 = vmatprep.subr.bf16.mxu0 0
    %296 = vmatpush1.bf16.msra.mxu0 0
    %297 = vmatprep.subr.bf16.mxu0 0
    %298 = vmatpush1.bf16.msra.mxu0 0
    %299 = vmatprep.subr.bf16.mxu0 0
    %300 = vmatpush1.bf16.msra.mxu0 0
    %301 = vmatprep.mubr.bf16.mxu0 0
    %302 = vmatmul.mubr.bf16.gmra.mrb[0].mxu0 %v263
    %v303 = vpop.f32.mrb[0].mxu0
    %v304 = vadd.f32 0.0, %v303
    %v305 = vpop.f32.mrb[0].mxu0
    %v306 = vpop.f32.mrb[0].mxu0
    %v307 = vpop.f32.mrb[0].mxu0
    %308 = vdwg.mxu0
    %309 = vrot.lane.b32.xlu0 %v130, 64
    %v310 = vpop.permute.xlu0 %309
    %v312 = vsel %vm134, %v259, 0
    %v315 = vsel %vm265, %v310, 0
    %317 = vmatprep.subr.bf16.mxu0 0
    %318 = vmatpush1.bf16.msra.mxu0 %v315
    %319 = vmatprep.subr.bf16.mxu0 0
    %320 = vmatpush1.bf16.msra.mxu0 0
    %321 = vmatprep.subr.bf16.mxu0 0
    %322 = vmatpush1.bf16.msra.mxu0 0
    %323 = vmatprep.subr.bf16.mxu0 0
    %324 = vmatpush1.bf16.msra.mxu0 0
    %325 = vmatprep.subr.bf16.mxu0 0
    %326 = vmatpush1.bf16.msra.mxu0 0
    %327 = vmatprep.subr.bf16.mxu0 0
    %328 = vmatpush1.bf16.msra.mxu0 0
    %329 = vmatprep.subr.bf16.mxu0 0
    %330 = vmatpush1.bf16.msra.mxu0 0
    %331 = vmatprep.subr.bf16.mxu0 0
    %332 = vmatpush1.bf16.msra.mxu0 0
    %333 = vmatprep.subr.bf16.mxu0 0
    %334 = vmatpush1.bf16.msra.mxu0 0
    %335 = vmatprep.subr.bf16.mxu0 0
    %336 = vmatpush1.bf16.msra.mxu0 0
    %337 = vmatprep.subr.bf16.mxu0 0
    %338 = vmatpush1.bf16.msra.mxu0 0
    %339 = vmatprep.subr.bf16.mxu0 0
    %340 = vmatpush1.bf16.msra.mxu0 0
    %341 = vmatprep.subr.bf16.mxu0 0
    %342 = vmatpush1.bf16.msra.mxu0 0
    %343 = vmatprep.subr.bf16.mxu0 0
    %344 = vmatpush1.bf16.msra.mxu0 0
    %345 = vmatprep.subr.bf16.mxu0 0
    %346 = vmatpush1.bf16.msra.mxu0 0
    %347 = vmatprep.subr.bf16.mxu0 0
    %348 = vmatpush1.bf16.msra.mxu0 0
    %349 = vmatprep.mubr.bf16.mxu0 0
    %350 = vmatmul.mubr.bf16.gmra.mrb[0].mxu0 %v312
    %v351 = vpop.f32.mrb[0].mxu0
    %v352 = vadd.f32 0.0, %v351
    %v353 = vpop.f32.mrb[0].mxu0
    %v354 = vpop.f32.mrb[0].mxu0
    %v355 = vpop.f32.mrb[0].mxu0
    %356 = vdwg.mxu0
    %v357 = vpack.c.bf16 %v352, %v304
    %v358 = vld [vmem:[#allocation7] sm:$0xf]
    %359 = vrot.lane.b32.xlu0 %v129, 120
    %v360 = vpop.permute.xlu0 %359
    %361 = vrot.lane.b32.xlu0 %v129, 88
    %v362 = vpop.permute.xlu0 %361
    %v364 = vsel %vm134, %v360, 0
    %v367 = vsel %vm134, %v362, 0
    %369 = vmatprep.subr.bf16.mxu0 0
    %370 = vmatpush1.bf16.xpose.msra.mxu0 %v367
    %371 = vmatprep.subr.bf16.mxu0 0
    %372 = vmatpush1.bf16.xpose.msra.mxu0 0
    %373 = vmatprep.subr.bf16.mxu0 0
    %374 = vmatpush1.bf16.xpose.msra.mxu0 0
    %375 = vmatprep.subr.bf16.mxu0 0
    %376 = vmatpush1.bf16.xpose.msra.mxu0 0
    %377 = vmatprep.subr.bf16.mxu0 0
    %378 = vmatpush1.bf16.xpose.msra.mxu0 0
    %379 = vmatprep.subr.bf16.mxu0 0
    %380 = vmatpush1.bf16.xpose.msra.mxu0 0
    %381 = vmatprep.subr.bf16.mxu0 0
    %382 = vmatpush1.bf16.xpose.msra.mxu0 0
    %383 = vmatprep.subr.bf16.mxu0 0
    %384 = vmatpush1.bf16.xpose.msra.mxu0 0
    %385 = vmatprep.subr.bf16.mxu0 0
    %386 = vmatpush1.bf16.xpose.msra.mxu0 0
    %387 = vmatprep.subr.bf16.mxu0 0
    %388 = vmatpush1.bf16.xpose.msra.mxu0 0
    %389 = vmatprep.subr.bf16.mxu0 0
    %390 = vmatpush1.bf16.xpose.msra.mxu0 0
    %391 = vmatprep.subr.bf16.mxu0 0
    %392 = vmatpush1.bf16.xpose.msra.mxu0 0
    %393 = vmatprep.subr.bf16.mxu0 0
    %394 = vmatpush1.bf16.xpose.msra.mxu0 0
    %395 = vmatprep.subr.bf16.mxu0 0
    %396 = vmatpush1.bf16.xpose.msra.mxu0 0
    %397 = vmatprep.subr.bf16.mxu0 0
    %398 = vmatpush1.bf16.xpose.msra.mxu0 0
    %399 = vmatprep.subr.bf16.mxu0 0
    %400 = vmatpush1.bf16.xpose.msra.mxu0 0
    %401 = vmatprep.mubr.bf16.mxu0 0
    %402 = vmatmul.mubr.bf16.gmra.mrb[0].mxu0 %v364
    %v403 = vpop.f32.mrb[0].mxu0
    %v404 = vadd.f32 0.0, %v403
    %v405 = vpop.f32.mrb[0].mxu0
    %v406 = vpop.f32.mrb[0].mxu0
    %v407 = vpop.f32.mrb[0].mxu0
    %408 = vdwg.mxu0
    %409 = vrot.lane.b32.xlu0 %v130, 120
    %v410 = vpop.permute.xlu0 %409
    %411 = vrot.lane.b32.xlu0 %v130, 88
    %v412 = vpop.permute.xlu0 %411
    %v414 = vsel %vm134, %v410, 0
    %v417 = vsel %vm134, %v412, 0
    %419 = vmatprep.subr.bf16.mxu0 0
    %420 = vmatpush1.bf16.xpose.msra.mxu0 %v417
    %421 = vmatprep.subr.bf16.mxu0 0
    %422 = vmatpush1.bf16.xpose.msra.mxu0 0
    %423 = vmatprep.subr.bf16.mxu0 0
    %424 = vmatpush1.bf16.xpose.msra.mxu0 0
    %425 = vmatprep.subr.bf16.mxu0 0
    %426 = vmatpush1.bf16.xpose.msra.mxu0 0
    %427 = vmatprep.subr.bf16.mxu0 0
    %428 = vmatpush1.bf16.xpose.msra.mxu0 0
    %429 = vmatprep.subr.bf16.mxu0 0
    %430 = vmatpush1.bf16.xpose.msra.mxu0 0
    %431 = vmatprep.subr.bf16.mxu0 0
    %432 = vmatpush1.bf16.xpose.msra.mxu0 0
    %433 = vmatprep.subr.bf16.mxu0 0
    %434 = vmatpush1.bf16.xpose.msra.mxu0 0
    %435 = vmatprep.subr.bf16.mxu0 0
    %436 = vmatpush1.bf16.xpose.msra.mxu0 0
    %437 = vmatprep.subr.bf16.mxu0 0
    %438 = vmatpush1.bf16.xpose.msra.mxu0 0
    %439 = vmatprep.subr.bf16.mxu0 0
    %440 = vmatpush1.bf16.xpose.msra.mxu0 0
    %441 = vmatprep.subr.bf16.mxu0 0
    %442 = vmatpush1.bf16.xpose.msra.mxu0 0
    %443 = vmatprep.subr.bf16.mxu0 0
    %444 = vmatpush1.bf16.xpose.msra.mxu0 0
    %445 = vmatprep.subr.bf16.mxu0 0
    %446 = vmatpush1.bf16.xpose.msra.mxu0 0
    %447 = vmatprep.subr.bf16.mxu0 0
    %448 = vmatpush1.bf16.xpose.msra.mxu0 0
    %449 = vmatprep.subr.bf16.mxu0 0
    %450 = vmatpush1.bf16.xpose.msra.mxu0 0
    %451 = vmatprep.mubr.bf16.mxu0 0
    %452 = vmatmul.mubr.bf16.gmra.mrb[0].mxu0 %v414
    %v453 = vpop.f32.mrb[0].mxu0
    %v454 = vadd.f32 0.0, %v453
    %v455 = vpop.f32.mrb[0].mxu0
    %v456 = vpop.f32.mrb[0].mxu0
    %v457 = vpop.f32.mrb[0].mxu0
    %458 = vdwg.mxu0
    %v459 = vmul.f32 %v404, 0.35355338
    %v460 = vmul.f32 %v454, 0.35355338
    %v461 = vsel %vm233, %v459, -inf
    %v462 = vsel %vm233, %v460, -inf
    %v463 = vsel %vm134, %v461, -inf
    %464 = vmax.xlane.f32.xlu0 %v463
    %v465 = vpop.xlane.xlu0 %464
    %v466 = vsel %vm134, %v462, -inf
    %467 = vmax.xlane.f32.xlu0 %v466
    %v468 = vpop.xlane.xlu0 %467
    %v469 = vsub.f32 %v461, %v465
    %v470 = vsub.f32 %v462, %v468
    %v471 = vmul.f32 %v469, 1.442695
    %v472 = vpow.pop %v471
    %v473 = vmul.f32 %v470, 1.442695
    %v474 = vpow.pop %v473
    %v475 = vsel %vm134, %v472, 0.0
    %476 = vadd.xlane.f32.xlu0 %v475
    %v477 = vpop.xlane.xlu0 %476
    %v478 = vsel %vm134, %v474, 0.0
    %479 = vadd.xlane.f32.xlu0 %v478
    %v480 = vpop.xlane.xlu0 %479
    %v481 = vrcp.pop %v477
    %v482 = vrcp.pop %v480
    %v483 = vmul.f32 %v472, %v481
    %v484 = vmul.f32 %v474, %v482
    %v485 = vpack.c.bf16 %v483, %v483
    %v486 = vpack.c.bf16 %v484, %v484
    %487 = vrot.lane.b32.xlu0 %v129, 56
    %v488 = vpop.permute.xlu0 %487
    %v490 = vsel %vm134, %v485, 0
    %v493 = vsel %vm265, %v488, 0
    %495 = vmatprep.subr.bf16.mxu0 0
    %496 = vmatpush1.bf16.msra.mxu0 %v493
    %497 = vmatprep.subr.bf16.mxu0 0
    %498 = vmatpush1.bf16.msra.mxu0 0
    %499 = vmatprep.subr.bf16.mxu0 0
    %500 = vmatpush1.bf16.msra.mxu0 0
    %501 = vmatprep.subr.bf16.mxu0 0
    %502 = vmatpush1.bf16.msra.mxu0 0
    %503 = vmatprep.subr.bf16.mxu0 0
    %504 = vmatpush1.bf16.msra.mxu0 0
    %505 = vmatprep.subr.bf16.mxu0 0
    %506 = vmatpush1.bf16.msra.mxu0 0
    %507 = vmatprep.subr.bf16.mxu0 0
    %508 = vmatpush1.bf16.msra.mxu0 0
    %509 = vmatprep.subr.bf16.mxu0 0
    %510 = vmatpush1.bf16.msra.mxu0 0
    %511 = vmatprep.subr.bf16.mxu0 0
    %512 = vmatpush1.bf16.msra.mxu0 0
    %513 = vmatprep.subr.bf16.mxu0 0
    %514 = vmatpush1.bf16.msra.mxu0 0
    %515 = vmatprep.subr.bf16.mxu0 0
    %516 = vmatpush1.bf16.msra.mxu0 0
    %517 = vmatprep.subr.bf16.mxu0 0
    %518 = vmatpush1.bf16.msra.mxu0 0
    %519 = vmatprep.subr.bf16.mxu0 0
    %520 = vmatpush1.bf16.msra.mxu0 0
    %521 = vmatprep.subr.bf16.mxu0 0
    %522 = vmatpush1.bf16.msra.mxu0 0
    %523 = vmatprep.subr.bf16.mxu0 0
    %524 = vmatpush1.bf16.msra.mxu0 0
    %525 = vmatprep.subr.bf16.mxu0 0
    %526 = vmatpush1.bf16.msra.mxu0 0
    %527 = vmatprep.mubr.bf16.mxu0 0
    %528 = vmatmul.mubr.bf16.gmra.mrb[0].mxu0 %v490
    %v529 = vpop.f32.mrb[0].mxu0
    %v530 = vadd.f32 0.0, %v529
    %v531 = vpop.f32.mrb[0].mxu0
    %v532 = vpop.f32.mrb[0].mxu0
    %v533 = vpop.f32.mrb[0].mxu0
    %534 = vdwg.mxu0
    %535 = vrot.lane.b32.xlu0 %v130, 56
    %v536 = vpop.permute.xlu0 %535
    %v538 = vsel %vm134, %v486, 0
    %v541 = vsel %vm265, %v536, 0
    %543 = vmatprep.subr.bf16.mxu0 0
    %544 = vmatpush1.bf16.msra.mxu0 %v541
    %545 = vmatprep.subr.bf16.mxu0 0
    %546 = vmatpush1.bf16.msra.mxu0 0
    %547 = vmatprep.subr.bf16.mxu0 0
    %548 = vmatpush1.bf16.msra.mxu0 0
    %549 = vmatprep.subr.bf16.mxu0 0
    %550 = vmatpush1.bf16.msra.mxu0 0
    %551 = vmatprep.subr.bf16.mxu0 0
    %552 = vmatpush1.bf16.msra.mxu0 0
    %553 = vmatprep.subr.bf16.mxu0 0
    %554 = vmatpush1.bf16.msra.mxu0 0
    %555 = vmatprep.subr.bf16.mxu0 0
    %556 = vmatpush1.bf16.msra.mxu0 0
    %557 = vmatprep.subr.bf16.mxu0 0
    %558 = vmatpush1.bf16.msra.mxu0 0
    %559 = vmatprep.subr.bf16.mxu0 0
    %560 = vmatpush1.bf16.msra.mxu0 0
    %561 = vmatprep.subr.bf16.mxu0 0
    %562 = vmatpush1.bf16.msra.mxu0 0
    %563 = vmatprep.subr.bf16.mxu0 0
    %564 = vmatpush1.bf16.msra.mxu0 0
    %565 = vmatprep.subr.bf16.mxu0 0
    %566 = vmatpush1.bf16.msra.mxu0 0
    %567 = vmatprep.subr.bf16.mxu0 0
    %568 = vmatpush1.bf16.msra.mxu0 0
    %569 = vmatprep.subr.bf16.mxu0 0
    %570 = vmatpush1.bf16.msra.mxu0 0
    %571 = vmatprep.subr.bf16.mxu0 0
    %572 = vmatpush1.bf16.msra.mxu0 0
    %573 = vmatprep.subr.bf16.mxu0 0
    %574 = vmatpush1.bf16.msra.mxu0 0
    %575 = vmatprep.mubr.bf16.mxu0 0
    %576 = vmatmul.mubr.bf16.gmra.mrb[0].mxu0 %v538
    %v577 = vpop.f32.mrb[0].mxu0
    %v578 = vadd.f32 0.0, %v577
    %v579 = vpop.f32.mrb[0].mxu0
    %v580 = vpop.f32.mrb[0].mxu0
    %v581 = vpop.f32.mrb[0].mxu0
    %582 = vdwg.mxu0
    %v583 = vpack.c.bf16 %v578, %v530
    %s584 = scalar_lea.vmem [#allocation7], 4
    %v585 = vld [vmem:[%s584] sm:$0xf]
    %v587 = vsel %vm134, %v583, 0
    %v590 = vsel %vm265, %v585, 0
    %592 = vmatprep.subr.bf16.mxu0 0
    %593 = vmatpush1.bf16.msra.mxu0 %v590
    %594 = vmatprep.subr.bf16.mxu0 0
    %595 = vmatpush1.bf16.msra.mxu0 0
    %596 = vmatprep.subr.bf16.mxu0 0
    %597 = vmatpush1.bf16.msra.mxu0 0
    %598 = vmatprep.subr.bf16.mxu0 0
    %599 = vmatpush1.bf16.msra.mxu0 0
    %600 = vmatprep.subr.bf16.mxu0 0
    %601 = vmatpush1.bf16.msra.mxu0 0
    %602 = vmatprep.subr.bf16.mxu0 0
    %603 = vmatpush1.bf16.msra.mxu0 0
    %604 = vmatprep.subr.bf16.mxu0 0
    %605 = vmatpush1.bf16.msra.mxu0 0
    %606 = vmatprep.subr.bf16.mxu0 0
    %607 = vmatpush1.bf16.msra.mxu0 0
    %608 = vmatprep.subr.bf16.mxu0 0
    %609 = vmatpush1.bf16.msra.mxu0 0
    %610 = vmatprep.subr.bf16.mxu0 0
    %611 = vmatpush1.bf16.msra.mxu0 0
    %612 = vmatprep.subr.bf16.mxu0 0
    %613 = vmatpush1.bf16.msra.mxu0 0
    %614 = vmatprep.subr.bf16.mxu0 0
    %615 = vmatpush1.bf16.msra.mxu0 0
    %616 = vmatprep.subr.bf16.mxu0 0
    %617 = vmatpush1.bf16.msra.mxu0 0
    %618 = vmatprep.subr.bf16.mxu0 0
    %619 = vmatpush1.bf16.msra.mxu0 0
    %620 = vmatprep.subr.bf16.mxu0 0
    %621 = vmatpush1.bf16.msra.mxu0 0
    %622 = vmatprep.subr.bf16.mxu0 0
    %623 = vmatpush1.bf16.msra.mxu0 0
    %624 = vmatprep.mubr.bf16.mxu0 0
    %625 = vmatmul.mubr.bf16.gmra.mrb[0].mxu0 %v587
    %v626 = vpop.f32.mrb[0].mxu0
    %v627 = vadd.f32 0.0, %v626
    %v628 = vpop.f32.mrb[0].mxu0
    %v629 = vpop.f32.mrb[0].mxu0
    %v630 = vadd.f32 0.0, %v629
    %v631 = vpop.f32.mrb[0].mxu0
    %632 = vdwg.mxu0
    %v634 = vsel %vm134, %v357, 0
    %v637 = vsel %vm265, %v358, 0
    %639 = vmatprep.subr.bf16.mxu0 0
    %640 = vmatpush1.bf16.msra.mxu0 %v637
    %641 = vmatprep.subr.bf16.mxu0 0
    %642 = vmatpush1.bf16.msra.mxu0 0
    %643 = vmatprep.subr.bf16.mxu0 0
    %644 = vmatpush1.bf16.msra.mxu0 0
    %645 = vmatprep.subr.bf16.mxu0 0
    %646 = vmatpush1.bf16.msra.mxu0 0
    %647 = vmatprep.subr.bf16.mxu0 0
    %648 = vmatpush1.bf16.msra.mxu0 0
    %649 = vmatprep.subr.bf16.mxu0 0
    %650 = vmatpush1.bf16.msra.mxu0 0
    %651 = vmatprep.subr.bf16.mxu0 0
    %652 = vmatpush1.bf16.msra.mxu0 0
    %653 = vmatprep.subr.bf16.mxu0 0
    %654 = vmatpush1.bf16.msra.mxu0 0
    %655 = vmatprep.subr.bf16.mxu0 0
    %656 = vmatpush1.bf16.msra.mxu0 0
    %657 = vmatprep.subr.bf16.mxu0 0
    %658 = vmatpush1.bf16.msra.mxu0 0
    %659 = vmatprep.subr.bf16.mxu0 0
    %660 = vmatpush1.bf16.msra.mxu0 0
    %661 = vmatprep.subr.bf16.mxu0 0
    %662 = vmatpush1.bf16.msra.mxu0 0
    %663 = vmatprep.subr.bf16.mxu0 0
    %664 = vmatpush1.bf16.msra.mxu0 0
    %665 = vmatprep.subr.bf16.mxu0 0
    %666 = vmatpush1.bf16.msra.mxu0 0
    %667 = vmatprep.subr.bf16.mxu0 0
    %668 = vmatpush1.bf16.msra.mxu0 0
    %669 = vmatprep.subr.bf16.mxu0 0
    %670 = vmatpush1.bf16.msra.mxu0 0
    %671 = vmatprep.mubr.bf16.mxu0 0
    %672 = vmatmul.mubr.bf16.gmra.mrb[0].mxu0 %v634
    %v673 = vpop.f32.mrb[0].mxu0
    %v674 = vadd.f32 %v627, %v673
    %v675 = vpop.f32.mrb[0].mxu0
    %v676 = vpop.f32.mrb[0].mxu0
    %v677 = vadd.f32 %v630, %v676
    %v678 = vpop.f32.mrb[0].mxu0
    %679 = vdwg.mxu0
    %680 = vrot.lane.b32.xlu0 %v129, 112
    %v681 = vpop.permute.xlu0 %680
    %682 = vrot.lane.b32.xlu0 %v129, 80
    %v683 = vpop.permute.xlu0 %682
    %v685 = vsel %vm134, %v681, 0
    %v688 = vsel %vm134, %v683, 0
    %690 = vmatprep.subr.bf16.mxu0 0
    %691 = vmatpush1.bf16.xpose.msra.mxu0 %v688
    %692 = vmatprep.subr.bf16.mxu0 0
    %693 = vmatpush1.bf16.xpose.msra.mxu0 0
    %694 = vmatprep.subr.bf16.mxu0 0
    %695 = vmatpush1.bf16.xpose.msra.mxu0 0
    %696 = vmatprep.subr.bf16.mxu0 0
    %697 = vmatpush1.bf16.xpose.msra.mxu0 0
    %698 = vmatprep.subr.bf16.mxu0 0
    %699 = vmatpush1.bf16.xpose.msra.mxu0 0
    %700 = vmatprep.subr.bf16.mxu0 0
    %701 = vmatpush1.bf16.xpose.msra.mxu0 0
    %702 = vmatprep.subr.bf16.mxu0 0
    %703 = vmatpush1.bf16.xpose.msra.mxu0 0
    %704 = vmatprep.subr.bf16.mxu0 0
    %705 = vmatpush1.bf16.xpose.msra.mxu0 0
    %706 = vmatprep.subr.bf16.mxu0 0
    %707 = vmatpush1.bf16.xpose.msra.mxu0 0
    %708 = vmatprep.subr.bf16.mxu0 0
    %709 = vmatpush1.bf16.xpose.msra.mxu0 0
    %710 = vmatprep.subr.bf16.mxu0 0
    %711 = vmatpush1.bf16.xpose.msra.mxu0 0
    %712 = vmatprep.subr.bf16.mxu0 0
    %713 = vmatpush1.bf16.xpose.msra.mxu0 0
    %714 = vmatprep.subr.bf16.mxu0 0
    %715 = vmatpush1.bf16.xpose.msra.mxu0 0
    %716 = vmatprep.subr.bf16.mxu0 0
    %717 = vmatpush1.bf16.xpose.msra.mxu0 0
    %718 = vmatprep.subr.bf16.mxu0 0
    %719 = vmatpush1.bf16.xpose.msra.mxu0 0
    %720 = vmatprep.subr.bf16.mxu0 0
    %721 = vmatpush1.bf16.xpose.msra.mxu0 0
    %722 = vmatprep.mubr.bf16.mxu0 0
    %723 = vmatmul.mubr.bf16.gmra.mrb[0].mxu0 %v685
    %v724 = vpop.f32.mrb[0].mxu0
    %v725 = vadd.f32 0.0, %v724
    %v726 = vpop.f32.mrb[0].mxu0
    %v727 = vpop.f32.mrb[0].mxu0
    %v728 = vpop.f32.mrb[0].mxu0
    %729 = vdwg.mxu0
    %730 = vrot.lane.b32.xlu0 %v130, 112
    %v731 = vpop.permute.xlu0 %730
    %732 = vrot.lane.b32.xlu0 %v130, 80
    %v733 = vpop.permute.xlu0 %732
    %v735 = vsel %vm134, %v731, 0
    %v738 = vsel %vm134, %v733, 0
    %740 = vmatprep.subr.bf16.mxu0 0
    %741 = vmatpush1.bf16.xpose.msra.mxu0 %v738
    %742 = vmatprep.subr.bf16.mxu0 0
    %743 = vmatpush1.bf16.xpose.msra.mxu0 0
    %744 = vmatprep.subr.bf16.mxu0 0
    %745 = vmatpush1.bf16.xpose.msra.mxu0 0
    %746 = vmatprep.subr.bf16.mxu0 0
    %747 = vmatpush1.bf16.xpose.msra.mxu0 0
    %748 = vmatprep.subr.bf16.mxu0 0
    %749 = vmatpush1.bf16.xpose.msra.mxu0 0
    %750 = vmatprep.subr.bf16.mxu0 0
    %751 = vmatpush1.bf16.xpose.msra.mxu0 0
    %752 = vmatprep.subr.bf16.mxu0 0
    %753 = vmatpush1.bf16.xpose.msra.mxu0 0
    %754 = vmatprep.subr.bf16.mxu0 0
    %755 = vmatpush1.bf16.xpose.msra.mxu0 0
    %756 = vmatprep.subr.bf16.mxu0 0
    %757 = vmatpush1.bf16.xpose.msra.mxu0 0
    %758 = vmatprep.subr.bf16.mxu0 0
    %759 = vmatpush1.bf16.xpose.msra.mxu0 0
    %760 = vmatprep.subr.bf16.mxu0 0
    %761 = vmatpush1.bf16.xpose.msra.mxu0 0
    %762 = vmatprep.subr.bf16.mxu0 0
    %763 = vmatpush1.bf16.xpose.msra.mxu0 0
    %764 = vmatprep.subr.bf16.mxu0 0
    %765 = vmatpush1.bf16.xpose.msra.mxu0 0
    %766 = vmatprep.subr.bf16.mxu0 0
    %767 = vmatpush1.bf16.xpose.msra.mxu0 0
    %768 = vmatprep.subr.bf16.mxu0 0
    %769 = vmatpush1.bf16.xpose.msra.mxu0 0
    %770 = vmatprep.subr.bf16.mxu0 0
    %771 = vmatpush1.bf16.xpose.msra.mxu0 0
    %772 = vmatprep.mubr.bf16.mxu0 0
    %773 = vmatmul.mubr.bf16.gmra.mrb[0].mxu0 %v735
    %v774 = vpop.f32.mrb[0].mxu0
    %v775 = vadd.f32 0.0, %v774
    %v776 = vpop.f32.mrb[0].mxu0
    %v777 = vpop.f32.mrb[0].mxu0
    %v778 = vpop.f32.mrb[0].mxu0
    %779 = vdwg.mxu0
    %v780 = vmul.f32 %v725, 0.35355338
    %v781 = vmul.f32 %v775, 0.35355338
    %v782 = vsel %vm233, %v780, -inf
    %v783 = vsel %vm233, %v781, -inf
    %v784 = vsel %vm134, %v782, -inf
    %785 = vmax.xlane.f32.xlu0 %v784
    %v786 = vpop.xlane.xlu0 %785
    %v787 = vsel %vm134, %v783, -inf
    %788 = vmax.xlane.f32.xlu0 %v787
    %v789 = vpop.xlane.xlu0 %788
    %v790 = vsub.f32 %v782, %v786
    %v791 = vsub.f32 %v783, %v789
    %v792 = vmul.f32 %v790, 1.442695
    %v793 = vpow.pop %v792
    %v794 = vmul.f32 %v791, 1.442695
    %v795 = vpow.pop %v794
    %v796 = vsel %vm134, %v793, 0.0
    %797 = vadd.xlane.f32.xlu0 %v796
    %v798 = vpop.xlane.xlu0 %797
    %v799 = vsel %vm134, %v795, 0.0
    %800 = vadd.xlane.f32.xlu0 %v799
    %v801 = vpop.xlane.xlu0 %800
    %v802 = vrcp.pop %v798
    %v803 = vrcp.pop %v801
    %v804 = vmul.f32 %v793, %v802
    %v805 = vmul.f32 %v795, %v803
    %v806 = vpack.c.bf16 %v804, %v804
    %v807 = vpack.c.bf16 %v805, %v805
    %808 = vrot.lane.b32.xlu0 %v129, 48
    %v809 = vpop.permute.xlu0 %808
    %v811 = vsel %vm134, %v806, 0
    %v814 = vsel %vm265, %v809, 0
    %816 = vmatprep.subr.bf16.mxu0 0
    %817 = vmatpush1.bf16.msra.mxu0 %v814
    %818 = vmatprep.subr.bf16.mxu0 0
    %819 = vmatpush1.bf16.msra.mxu0 0
    %820 = vmatprep.subr.bf16.mxu0 0
    %821 = vmatpush1.bf16.msra.mxu0 0
    %822 = vmatprep.subr.bf16.mxu0 0
    %823 = vmatpush1.bf16.msra.mxu0 0
    %824 = vmatprep.subr.bf16.mxu0 0
    %825 = vmatpush1.bf16.msra.mxu0 0
    %826 = vmatprep.subr.bf16.mxu0 0
    %827 = vmatpush1.bf16.msra.mxu0 0
    %828 = vmatprep.subr.bf16.mxu0 0
    %829 = vmatpush1.bf16.msra.mxu0 0
    %830 = vmatprep.subr.bf16.mxu0 0
    %831 = vmatpush1.bf16.msra.mxu0 0
    %832 = vmatprep.subr.bf16.mxu0 0
    %833 = vmatpush1.bf16.msra.mxu0 0
    %834 = vmatprep.subr.bf16.mxu0 0
    %835 = vmatpush1.bf16.msra.mxu0 0
    %836 = vmatprep.subr.bf16.mxu0 0
    %837 = vmatpush1.bf16.msra.mxu0 0
    %838 = vmatprep.subr.bf16.mxu0 0
    %839 = vmatpush1.bf16.msra.mxu0 0
    %840 = vmatprep.subr.bf16.mxu0 0
    %841 = vmatpush1.bf16.msra.mxu0 0
    %842 = vmatprep.subr.bf16.mxu0 0
    %843 = vmatpush1.bf16.msra.mxu0 0
    %844 = vmatprep.subr.bf16.mxu0 0
    %845 = vmatpush1.bf16.msra.mxu0 0
    %846 = vmatprep.subr.bf16.mxu0 0
    %847 = vmatpush1.bf16.msra.mxu0 0
    %848 = vmatprep.mubr.bf16.mxu0 0
    %849 = vmatmul.mubr.bf16.gmra.mrb[0].mxu0 %v811
    %v850 = vpop.f32.mrb[0].mxu0
    %v851 = vadd.f32 0.0, %v850
    %v852 = vpop.f32.mrb[0].mxu0
    %v853 = vpop.f32.mrb[0].mxu0
    %v854 = vpop.f32.mrb[0].mxu0
    %855 = vdwg.mxu0
    %856 = vrot.lane.b32.xlu0 %v130, 48
    %v857 = vpop.permute.xlu0 %856
    %v859 = vsel %vm134, %v807, 0
    %v862 = vsel %vm265, %v857, 0
    %864 = vmatprep.subr.bf16.mxu0 0
    %865 = vmatpush1.bf16.msra.mxu0 %v862
    %866 = vmatprep.subr.bf16.mxu0 0
    %867 = vmatpush1.bf16.msra.mxu0 0
    %868 = vmatprep.subr.bf16.mxu0 0
    %869 = vmatpush1.bf16.msra.mxu0 0
    %870 = vmatprep.subr.bf16.mxu0 0
    %871 = vmatpush1.bf16.msra.mxu0 0
    %872 = vmatprep.subr.bf16.mxu0 0
    %873 = vmatpush1.bf16.msra.mxu0 0
    %874 = vmatprep.subr.bf16.mxu0 0
    %875 = vmatpush1.bf16.msra.mxu0 0
    %876 = vmatprep.subr.bf16.mxu0 0
    %877 = vmatpush1.bf16.msra.mxu0 0
    %878 = vmatprep.subr.bf16.mxu0 0
    %879 = vmatpush1.bf16.msra.mxu0 0
    %880 = vmatprep.subr.bf16.mxu0 0
    %881 = vmatpush1.bf16.msra.mxu0 0
    %882 = vmatprep.subr.bf16.mxu0 0
    %883 = vmatpush1.bf16.msra.mxu0 0
    %884 = vmatprep.subr.bf16.mxu0 0
    %885 = vmatpush1.bf16.msra.mxu0 0
    %886 = vmatprep.subr.bf16.mxu0 0
    %887 = vmatpush1.bf16.msra.mxu0 0
    %888 = vmatprep.subr.bf16.mxu0 0
    %889 = vmatpush1.bf16.msra.mxu0 0
    %890 = vmatprep.subr.bf16.mxu0 0
    %891 = vmatpush1.bf16.msra.mxu0 0
    %892 = vmatprep.subr.bf16.mxu0 0
    %893 = vmatpush1.bf16.msra.mxu0 0
    %894 = vmatprep.subr.bf16.mxu0 0
    %895 = vmatpush1.bf16.msra.mxu0 0
    %896 = vmatprep.mubr.bf16.mxu0 0
    %897 = vmatmul.mubr.bf16.gmra.mrb[0].mxu0 %v859
    %v898 = vpop.f32.mrb[0].mxu0
    %v899 = vadd.f32 0.0, %v898
    %v900 = vpop.f32.mrb[0].mxu0
    %v901 = vpop.f32.mrb[0].mxu0
    %v902 = vpop.f32.mrb[0].mxu0
    %903 = vdwg.mxu0
    %v904 = vpack.c.bf16 %v899, %v851
    %s905 = scalar_lea.vmem [#allocation7], 8
    %v906 = vld [vmem:[%s905] sm:$0xf]
    %v908 = vsel %vm134, %v904, 0
    %v911 = vsel %vm265, %v906, 0
    %913 = vmatprep.subr.bf16.mxu0 0
    %914 = vmatpush1.bf16.msra.mxu0 %v911
    %915 = vmatprep.subr.bf16.mxu0 0
    %916 = vmatpush1.bf16.msra.mxu0 0
    %917 = vmatprep.subr.bf16.mxu0 0
    %918 = vmatpush1.bf16.msra.mxu0 0
    %919 = vmatprep.subr.bf16.mxu0 0
    %920 = vmatpush1.bf16.msra.mxu0 0
    %921 = vmatprep.subr.bf16.mxu0 0
    %922 = vmatpush1.bf16.msra.mxu0 0
    %923 = vmatprep.subr.bf16.mxu0 0
    %924 = vmatpush1.bf16.msra.mxu0 0
    %925 = vmatprep.subr.bf16.mxu0 0
    %926 = vmatpush1.bf16.msra.mxu0 0
    %927 = vmatprep.subr.bf16.mxu0 0
    %928 = vmatpush1.bf16.msra.mxu0 0
    %929 = vmatprep.subr.bf16.mxu0 0
    %930 = vmatpush1.bf16.msra.mxu0 0
    %931 = vmatprep.subr.bf16.mxu0 0
    %932 = vmatpush1.bf16.msra.mxu0 0
    %933 = vmatprep.subr.bf16.mxu0 0
    %934 = vmatpush1.bf16.msra.mxu0 0
    %935 = vmatprep.subr.bf16.mxu0 0
    %936 = vmatpush1.bf16.msra.mxu0 0
    %937 = vmatprep.subr.bf16.mxu0 0
    %938 = vmatpush1.bf16.msra.mxu0 0
    %939 = vmatprep.subr.bf16.mxu0 0
    %940 = vmatpush1.bf16.msra.mxu0 0
    %941 = vmatprep.subr.bf16.mxu0 0
    %942 = vmatpush1.bf16.msra.mxu0 0
    %943 = vmatprep.subr.bf16.mxu0 0
    %944 = vmatpush1.bf16.msra.mxu0 0
    %945 = vmatprep.mubr.bf16.mxu0 0
    %946 = vmatmul.mubr.bf16.gmra.mrb[0].mxu0 %v908
    %v947 = vpop.f32.mrb[0].mxu0
    %v948 = vadd.f32 0.0, %v947
    %v949 = vpop.f32.mrb[0].mxu0
    %v950 = vpop.f32.mrb[0].mxu0
    %v951 = vadd.f32 0.0, %v950
    %v952 = vpop.f32.mrb[0].mxu0
    %953 = vdwg.mxu0
    %v954 = vadd.f32 %v674, %v948
    %v955 = vadd.f32 %v677, %v951
    %956 = vrot.lane.b32.xlu0 %v129, 104
    %v957 = vpop.permute.xlu0 %956
    %958 = vrot.lane.b32.xlu0 %v129, 72
    %v959 = vpop.permute.xlu0 %958
    %v961 = vsel %vm134, %v957, 0
    %v964 = vsel %vm134, %v959, 0
    %966 = vmatprep.subr.bf16.mxu0 0
    %967 = vmatpush1.bf16.xpose.msra.mxu0 %v964
    %968 = vmatprep.subr.bf16.mxu0 0
    %969 = vmatpush1.bf16.xpose.msra.mxu0 0
    %970 = vmatprep.subr.bf16.mxu0 0
    %971 = vmatpush1.bf16.xpose.msra.mxu0 0
    %972 = vmatprep.subr.bf16.mxu0 0
    %973 = vmatpush1.bf16.xpose.msra.mxu0 0
    %974 = vmatprep.subr.bf16.mxu0 0
    %975 = vmatpush1.bf16.xpose.msra.mxu0 0
    %976 = vmatprep.subr.bf16.mxu0 0
    %977 = vmatpush1.bf16.xpose.msra.mxu0 0
    %978 = vmatprep.subr.bf16.mxu0 0
    %979 = vmatpush1.bf16.xpose.msra.mxu0 0
    %980 = vmatprep.subr.bf16.mxu0 0
    %981 = vmatpush1.bf16.xpose.msra.mxu0 0
    %982 = vmatprep.subr.bf16.mxu0 0
    %983 = vmatpush1.bf16.xpose.msra.mxu0 0
    %984 = vmatprep.subr.bf16.mxu0 0
    %985 = vmatpush1.bf16.xpose.msra.mxu0 0
    %986 = vmatprep.subr.bf16.mxu0 0
    %987 = vmatpush1.bf16.xpose.msra.mxu0 0
    %988 = vmatprep.subr.bf16.mxu0 0
    %989 = vmatpush1.bf16.xpose.msra.mxu0 0
    %990 = vmatprep.subr.bf16.mxu0 0
    %991 = vmatpush1.bf16.xpose.msra.mxu0 0
    %992 = vmatprep.subr.bf16.mxu0 0
    %993 = vmatpush1.bf16.xpose.msra.mxu0 0
    %994 = vmatprep.subr.bf16.mxu0 0
    %995 = vmatpush1.bf16.xpose.msra.mxu0 0
    %996 = vmatprep.subr.bf16.mxu0 0
    %997 = vmatpush1.bf16.xpose.msra.mxu0 0
    %998 = vmatprep.mubr.bf16.mxu0 0
    %999 = vmatmul.mubr.bf16.gmra.mrb[0].mxu0 %v961
    %v1000 = vpop.f32.mrb[0].mxu0
    %v1001 = vadd.f32 0.0, %v1000
    %v1002 = vpop.f32.mrb[0].mxu0
    %v1003 = vpop.f32.mrb[0].mxu0
    %v1004 = vpop.f32.mrb[0].mxu0
    %1005 = vdwg.mxu0
    %1006 = vrot.lane.b32.xlu0 %v130, 104
    %v1007 = vpop.permute.xlu0 %1006
    %1008 = vrot.lane.b32.xlu0 %v130, 72
    %v1009 = vpop.permute.xlu0 %1008
    %v1011 = vsel %vm134, %v1007, 0
    %v1014 = vsel %vm134, %v1009, 0
    %1016 = vmatprep.subr.bf16.mxu0 0
    %1017 = vmatpush1.bf16.xpose.msra.mxu0 %v1014
    %1018 = vmatprep.subr.bf16.mxu0 0
    %1019 = vmatpush1.bf16.xpose.msra.mxu0 0
    %1020 = vmatprep.subr.bf16.mxu0 0
    %1021 = vmatpush1.bf16.xpose.msra.mxu0 0
    %1022 = vmatprep.subr.bf16.mxu0 0
    %1023 = vmatpush1.bf16.xpose.msra.mxu0 0
    %1024 = vmatprep.subr.bf16.mxu0 0
    %1025 = vmatpush1.bf16.xpose.msra.mxu0 0
    %1026 = vmatprep.subr.bf16.mxu0 0
    %1027 = vmatpush1.bf16.xpose.msra.mxu0 0
    %1028 = vmatprep.subr.bf16.mxu0 0
    %1029 = vmatpush1.bf16.xpose.msra.mxu0 0
    %1030 = vmatprep.subr.bf16.mxu0 0
    %1031 = vmatpush1.bf16.xpose.msra.mxu0 0
    %1032 = vmatprep.subr.bf16.mxu0 0
    %1033 = vmatpush1.bf16.xpose.msra.mxu0 0
    %1034 = vmatprep.subr.bf16.mxu0 0
    %1035 = vmatpush1.bf16.xpose.msra.mxu0 0
    %1036 = vmatprep.subr.bf16.mxu0 0
    %1037 = vmatpush1.bf16.xpose.msra.mxu0 0
    %1038 = vmatprep.subr.bf16.mxu0 0
    %1039 = vmatpush1.bf16.xpose.msra.mxu0 0
    %1040 = vmatprep.subr.bf16.mxu0 0
    %1041 = vmatpush1.bf16.xpose.msra.mxu0 0
    %1042 = vmatprep.subr.bf16.mxu0 0
    %1043 = vmatpush1.bf16.xpose.msra.mxu0 0
    %1044 = vmatprep.subr.bf16.mxu0 0
    %1045 = vmatpush1.bf16.xpose.msra.mxu0 0
    %1046 = vmatprep.subr.bf16.mxu0 0
    %1047 = vmatpush1.bf16.xpose.msra.mxu0 0
    %1048 = vmatprep.mubr.bf16.mxu0 0
    %1049 = vmatmul.mubr.bf16.gmra.mrb[0].mxu0 %v1011
    %v1050 = vpop.f32.mrb[0].mxu0
    %v1051 = vadd.f32 0.0, %v1050
    %v1052 = vpop.f32.mrb[0].mxu0
    %v1053 = vpop.f32.mrb[0].mxu0
    %v1054 = vpop.f32.mrb[0].mxu0
    %1055 = vdwg.mxu0
    %v1056 = vmul.f32 %v1001, 0.35355338
    %v1057 = vmul.f32 %v1051, 0.35355338
    %v1058 = vsel %vm233, %v1056, -inf
    %v1059 = vsel %vm233, %v1057, -inf
    %v1060 = vsel %vm134, %v1058, -inf
    %1061 = vmax.xlane.f32.xlu0 %v1060
    %v1062 = vpop.xlane.xlu0 %1061
    %v1063 = vsel %vm134, %v1059, -inf
    %1064 = vmax.xlane.f32.xlu0 %v1063
    %v1065 = vpop.xlane.xlu0 %1064
    %v1066 = vsub.f32 %v1058, %v1062
    %v1067 = vsub.f32 %v1059, %v1065
    %v1068 = vmul.f32 %v1066, 1.442695
    %v1069 = vpow.pop %v1068
    %v1070 = vmul.f32 %v1067, 1.442695
    %v1071 = vpow.pop %v1070
    %v1072 = vsel %vm134, %v1069, 0.0
    %1073 = vadd.xlane.f32.xlu0 %v1072
    %v1074 = vpop.xlane.xlu0 %1073
    %v1075 = vsel %vm134, %v1071, 0.0
    %1076 = vadd.xlane.f32.xlu0 %v1075
    %v1077 = vpop.xlane.xlu0 %1076
    %v1078 = vrcp.pop %v1074
    %v1079 = vrcp.pop %v1077
    %v1080 = vmul.f32 %v1069, %v1078
    %v1081 = vmul.f32 %v1071, %v1079
    %v1082 = vpack.c.bf16 %v1080, %v1080
    %v1083 = vpack.c.bf16 %v1081, %v1081
    %1084 = vrot.lane.b32.xlu0 %v129, 40
    %v1085 = vpop.permute.xlu0 %1084
    %v1087 = vsel %vm134, %v1082, 0
    %v1090 = vsel %vm265, %v1085, 0
    %1092 = vmatprep.subr.bf16.mxu0 0
    %1093 = vmatpush1.bf16.msra.mxu0 %v1090
    %1094 = vmatprep.subr.bf16.mxu0 0
    %1095 = vmatpush1.bf16.msra.mxu0 0
    %1096 = vmatprep.subr.bf16.mxu0 0
    %1097 = vmatpush1.bf16.msra.mxu0 0
    %1098 = vmatprep.subr.bf16.mxu0 0
    %1099 = vmatpush1.bf16.msra.mxu0 0
    %1100 = vmatprep.subr.bf16.mxu0 0
    %1101 = vmatpush1.bf16.msra.mxu0 0
    %1102 = vmatprep.subr.bf16.mxu0 0
    %1103 = vmatpush1.bf16.msra.mxu0 0
    %1104 = vmatprep.subr.bf16.mxu0 0
    %1105 = vmatpush1.bf16.msra.mxu0 0
    %1106 = vmatprep.subr.bf16.mxu0 0
    %1107 = vmatpush1.bf16.msra.mxu0 0
    %1108 = vmatprep.subr.bf16.mxu0 0
    %1109 = vmatpush1.bf16.msra.mxu0 0
    %1110 = vmatprep.subr.bf16.mxu0 0
    %1111 = vmatpush1.bf16.msra.mxu0 0
    %1112 = vmatprep.subr.bf16.mxu0 0
    %1113 = vmatpush1.bf16.msra.mxu0 0
    %1114 = vmatprep.subr.bf16.mxu0 0
    %1115 = vmatpush1.bf16.msra.mxu0 0
    %1116 = vmatprep.subr.bf16.mxu0 0
    %1117 = vmatpush1.bf16.msra.mxu0 0
    %1118 = vmatprep.subr.bf16.mxu0 0
    %1119 = vmatpush1.bf16.msra.mxu0 0
    %1120 = vmatprep.subr.bf16.mxu0 0
    %1121 = vmatpush1.bf16.msra.mxu0 0
    %1122 = vmatprep.subr.bf16.mxu0 0
    %1123 = vmatpush1.bf16.msra.mxu0 0
    %1124 = vmatprep.mubr.bf16.mxu0 0
    %1125 = vmatmul.mubr.bf16.gmra.mrb[0].mxu0 %v1087
    %v1126 = vpop.f32.mrb[0].mxu0
    %v1127 = vadd.f32 0.0, %v1126
    %v1128 = vpop.f32.mrb[0].mxu0
    %v1129 = vpop.f32.mrb[0].mxu0
    %v1130 = vpop.f32.mrb[0].mxu0
    %1131 = vdwg.mxu0
    %1132 = vrot.lane.b32.xlu0 %v130, 40
    %v1133 = vpop.permute.xlu0 %1132
    %v1135 = vsel %vm134, %v1083, 0
    %v1138 = vsel %vm265, %v1133, 0
    %1140 = vmatprep.subr.bf16.mxu0 0
    %1141 = vmatpush1.bf16.msra.mxu0 %v1138
    %1142 = vmatprep.subr.bf16.mxu0 0
    %1143 = vmatpush1.bf16.msra.mxu0 0
    %1144 = vmatprep.subr.bf16.mxu0 0
    %1145 = vmatpush1.bf16.msra.mxu0 0
    %1146 = vmatprep.subr.bf16.mxu0 0
    %1147 = vmatpush1.bf16.msra.mxu0 0
    %1148 = vmatprep.subr.bf16.mxu0 0
    %1149 = vmatpush1.bf16.msra.mxu0 0
    %1150 = vmatprep.subr.bf16.mxu0 0
    %1151 = vmatpush1.bf16.msra.mxu0 0
    %1152 = vmatprep.subr.bf16.mxu0 0
    %1153 = vmatpush1.bf16.msra.mxu0 0
    %1154 = vmatprep.subr.bf16.mxu0 0
    %1155 = vmatpush1.bf16.msra.mxu0 0
    %1156 = vmatprep.subr.bf16.mxu0 0
    %1157 = vmatpush1.bf16.msra.mxu0 0
    %1158 = vmatprep.subr.bf16.mxu0 0
    %1159 = vmatpush1.bf16.msra.mxu0 0
    %1160 = vmatprep.subr.bf16.mxu0 0
    %1161 = vmatpush1.bf16.msra.mxu0 0
    %1162 = vmatprep.subr.bf16.mxu0 0
    %1163 = vmatpush1.bf16.msra.mxu0 0
    %1164 = vmatprep.subr.bf16.mxu0 0
    %1165 = vmatpush1.bf16.msra.mxu0 0
    %1166 = vmatprep.subr.bf16.mxu0 0
    %1167 = vmatpush1.bf16.msra.mxu0 0
    %1168 = vmatprep.subr.bf16.mxu0 0
    %1169 = vmatpush1.bf16.msra.mxu0 0
    %1170 = vmatprep.subr.bf16.mxu0 0
    %1171 = vmatpush1.bf16.msra.mxu0 0
    %1172 = vmatprep.mubr.bf16.mxu0 0
    %1173 = vmatmul.mubr.bf16.gmra.mrb[0].mxu0 %v1135
    %v1174 = vpop.f32.mrb[0].mxu0
    %v1175 = vadd.f32 0.0, %v1174
    %v1176 = vpop.f32.mrb[0].mxu0
    %v1177 = vpop.f32.mrb[0].mxu0
    %v1178 = vpop.f32.mrb[0].mxu0
    %1179 = vdwg.mxu0
    %v1180 = vpack.c.bf16 %v1175, %v1127
    %s1181 = scalar_lea.vmem [#allocation7], 12
    %v1182 = vld [vmem:[%s1181] sm:$0xf]
    %v1184 = vsel %vm134, %v1180, 0
    %v1187 = vsel %vm265, %v1182, 0
    %1189 = vmatprep.subr.bf16.mxu0 0
    %1190 = vmatpush1.bf16.msra.mxu0 %v1187
    %1191 = vmatprep.subr.bf16.mxu0 0
    %1192 = vmatpush1.bf16.msra.mxu0 0
    %1193 = vmatprep.subr.bf16.mxu0 0
    %1194 = vmatpush1.bf16.msra.mxu0 0
    %1195 = vmatprep.subr.bf16.mxu0 0
    %1196 = vmatpush1.bf16.msra.mxu0 0
    %1197 = vmatprep.subr.bf16.mxu0 0
    %1198 = vmatpush1.bf16.msra.mxu0 0
    %1199 = vmatprep.subr.bf16.mxu0 0
    %1200 = vmatpush1.bf16.msra.mxu0 0
    %1201 = vmatprep.subr.bf16.mxu0 0
    %1202 = vmatpush1.bf16.msra.mxu0 0
    %1203 = vmatprep.subr.bf16.mxu0 0
    %1204 = vmatpush1.bf16.msra.mxu0 0
    %1205 = vmatprep.subr.bf16.mxu0 0
    %1206 = vmatpush1.bf16.msra.mxu0 0
    %1207 = vmatprep.subr.bf16.mxu0 0
    %1208 = vmatpush1.bf16.msra.mxu0 0
    %1209 = vmatprep.subr.bf16.mxu0 0
    %1210 = vmatpush1.bf16.msra.mxu0 0
    %1211 = vmatprep.subr.bf16.mxu0 0
    %1212 = vmatpush1.bf16.msra.mxu0 0
    %1213 = vmatprep.subr.bf16.mxu0 0
    %1214 = vmatpush1.bf16.msra.mxu0 0
    %1215 = vmatprep.subr.bf16.mxu0 0
    %1216 = vmatpush1.bf16.msra.mxu0 0
    %1217 = vmatprep.subr.bf16.mxu0 0
    %1218 = vmatpush1.bf16.msra.mxu0 0
    %1219 = vmatprep.subr.bf16.mxu0 0
    %1220 = vmatpush1.bf16.msra.mxu0 0
    %1221 = vmatprep.mubr.bf16.mxu0 0
    %1222 = vmatmul.mubr.bf16.gmra.mrb[0].mxu0 %v1184
    %v1223 = vpop.f32.mrb[0].mxu0
    %v1224 = vadd.f32 0.0, %v1223
    %v1225 = vpop.f32.mrb[0].mxu0
    %v1226 = vpop.f32.mrb[0].mxu0
    %v1227 = vadd.f32 0.0, %v1226
    %v1228 = vpop.f32.mrb[0].mxu0
    %1229 = vdwg.mxu0
    %v1230 = vadd.f32 %v954, %v1224
    %v1231 = vadd.f32 %v955, %v1227
    %v1232 = vld [vmem:[%s3] sm:$0x1]
    %v1234 = vlaneseq
    %v1235 = vshrl.u32 %v1234, 7
    %v1236 = vsub.s32 0, %v1235
    %v1237 = vrot.slane %v1232, %v1236
    %v1239 = vadd.f32 %v1230, %v1237
    %v1240 = vadd.f32 %v1231, %v1237
    %1241 = vst.msk [vmem:[#allocation8] sm:$0xff] %vm79, %v1239
    %1242 = vst.msk [vmem:[#allocation8 + $0x8] sm:$0xff] %vm79, %v1240
    // Predicated region
    $region30: #{tpu_custom_call.1} parent=1 // pred_check
      _
    $region31: #{tpu_custom_call.1} parent=1 // pred_check_branch
      %1244 = sbr.rel (0) target = $region33
    $region32: #{tpu_custom_call.1} parent=1 // pred_region
      %s1246 = ssub.s32 256, 256
      %1247 = vsyncadd [#allocation4], %s1246
      %s1248 = sshll.u32 [#allocation8], 4
      %s1249 = int_to_ptr.vmem [resolvable:$true] %s1248
      %1254 = dma.vmem_to_hbm [thread:$0]  %s1249, 256, %s4, [#allocation4], 128, 128, 8
    $region33: #{tpu_custom_call.1} parent=1 // pred_fallthru
      _
    // Predicated region
    $region34: #{tpu_custom_call.1} parent=1 // pred_check
      _
    $region35: #{tpu_custom_call.1} parent=1 // pred_check_branch
      %1256 = sbr.rel (0) target = $region37
    $region36: #{tpu_custom_call.1} parent=1 // pred_region
      %1257 = dma.done [#allocation4], 256
    $region37: #{tpu_custom_call.1} parent=1 // pred_fallthru
      _
    %1258 = vsyncpa [#allocation3], 1
    %1259 = vsyncpa [#allocation6], 1
    %1260 = vsyncpa [#allocation4], 1

</llo_original>
